<compile_context>
chip_gen: v6e
topology: v6e:2x2x1
jax: 0.10.0
libtpu: 0.0.40
codegen_flags: <defaults>
</compile_context>

<pallas_src>
import functools

import jax
import jax.numpy as jnp
import numpy as np
from jax import lax
from jax.experimental import pallas as pl
from jax.experimental.pallas import tpu as pltpu


def _lstm_prune_kernel(x_ref,
                       wih0_ref, b0_ref, whh0_ref,
                       w1_ref, b1_ref,
                       wdec_ref, bdec_ref,
                       scores_ref, dec_ref,
                       xg_ref, hseq_ref,
                       *, hidden_dim):
    """Whole forward pass (recurrence + projection + log_softmax) in one kernel."""
    H = hidden_dim
    T = x_ref.shape[0]

    # ---- Hoisted layer-0 input projection (single big MXU matmul, M=T). ----
    xg_ref[...] = (jnp.dot(x_ref[...], wih0_ref[...],
                           preferred_element_type=jnp.float32)
                   + b0_ref[...])                                   # (T, 4H)

    # ---- Loop-invariant values (loaded/built once, live in vregs). ----
    whh0 = whh0_ref[...]                                            # (H, 4H)
    w1 = w1_ref[...]                                                # (2H, 4H)
    b1 = b1_ref[...]                                                # (1, 4H)
    lane = lax.broadcasted_iota(jnp.int32, (1, 4 * H), 1)
    g_mask = (lane >= 2 * H) & (lane < 3 * H)   # tanh window = gate 'g'

    def activate(gates):
        # 2 full-width EUP ops + 1 VPU select instead of 4 sub-vreg ops.
        return jnp.where(g_mask, jnp.tanh(gates), jax.nn.sigmoid(gates))

    def combine(act, c_prev):
        # gate layout follows PyTorch: [i, f, g, o] along the 4H axis.
        i = act[:, 0:H]
        f = act[:, H:2 * H]
        g = act[:, 2 * H:3 * H]
        o = act[:, 3 * H:4 * H]
        c_new = f * c_prev + i * g
        h_new = o * jnp.tanh(c_new)
        return h_new, c_new

    def step(t, carry):
        h0, c0, h1, c1 = carry
        # Layer 0: only the recurrent matmul remains on the serial path.
        gates0 = xg_ref[pl.ds(t, 1), :] + jnp.dot(
            h0, whh0, preferred_element_type=jnp.float32)
        h0n, c0n = combine(activate(gates0), c0)
        # Layer 1: one fused matmul over the stacked state [h0_new ; h1_prev].
        # (inter-layer dropout skipped: inference mode)
        s1 = jnp.concatenate([h0n, h1], axis=-1)                    # (1, 2H)
        gates1 = jnp.dot(s1, w1, preferred_element_type=jnp.float32) + b1
        h1n, c1n = combine(activate(gates1), c1)
        hseq_ref[pl.ds(t, 1), :] = h1n
        return (h0n, c0n, h1n, c1n)

    zeros = jnp.zeros((1, H), jnp.float32)
    lax.fori_loop(0, T, step, (zeros, zeros, zeros, zeros),
                  unroll=min(T, 8))

    # ---- Hoisted decoder projection + log_softmax, bulk stores. ----
    hs = hseq_ref[...]                                              # (T, H)
    dec = (jnp.dot(hs, wdec_ref[...], preferred_element_type=jnp.float32)
           + bdec_ref[...])                                         # (T, out)
    m = jnp.max(dec, axis=-1, keepdims=True)
    lse = m + jnp.log(jnp.sum(jnp.exp(dec - m), axis=-1, keepdims=True))
    dec_ref[...] = dec
    scores_ref[...] = dec - lse


def lstm_prune_forward(x, params):
    """x: (T, in_dim) float32. Returns (dec_scores, dec), each (T, out_dim)."""
    T, _ = x.shape
    H = params["whh0"].shape[1]
    out_dim = params["wdec"].shape[0]

    # Pre-transpose / fuse biases / stack layer-1 weights (pure glue).
    wih0T = params["wih0"].T                                  # (in_dim, 4H)
    b0 = (params["bih0"] + params["bhh0"]).reshape(1, 4 * H)  # (1, 4H)
    whh0T = params["whh0"].T                                  # (H, 4H)
    w1 = jnp.concatenate([params["wih1"].T, params["whh1"].T], axis=0)  # (2H, 4H)
    b1 = (params["bih1"] + params["bhh1"]).reshape(1, 4 * H)  # (1, 4H)
    wdecT = params["wdec"].T                                  # (H, out_dim)
    bdec = params["bdec"].reshape(1, out_dim)                 # (1, out_dim)

    vmem_spec = pl.BlockSpec(memory_space=pltpu.MemorySpace.VMEM)
    kernel = functools.partial(_lstm_prune_kernel, hidden_dim=H)

    fn = pl.pallas_call(
        kernel,
        out_shape=(jax.ShapeDtypeStruct((T, out_dim), jnp.float32),
                   jax.ShapeDtypeStruct((T, out_dim), jnp.float32)),
        in_specs=[vmem_spec] * 8,
        out_specs=(vmem_spec, vmem_spec),
        scratch_shapes=[pltpu.VMEM((T, 4 * H), jnp.float32),   # hoisted x-proj
                        pltpu.VMEM((T, H), jnp.float32)],      # h1 sequence
    )
    return fn(x, wih0T, b0, whh0T, w1, b1, wdecT, bdec)


def _ref_forward(x, params):
    """Pure-JAX reference (mirrors PyTorch nn.LSTM + Linear + log_softmax)."""
    H = params["whh0"].shape[1]

    def run_layer(inp, wih, whh, bih, bhh):
        def step(carry, x_t):
            h, c = carry
            g = x_t @ wih.T + h @ whh.T + bih + bhh
            i = jax.nn.sigmoid(g[0:H])
            f = jax.nn.sigmoid(g[H:2 * H])
            gg = jnp.tanh(g[2 * H:3 * H])
            o = jax.nn.sigmoid(g[3 * H:4 * H])
            c = f * c + i * gg
            h = o * jnp.tanh(c)
            return (h, c), h
        init = (jnp.zeros((H,), jnp.float32), jnp.zeros((H,), jnp.float32))
        _, hs = lax.scan(step, init, inp)
        return hs

    h_l0 = run_layer(x, params["wih0"], params["whh0"],
                     params["bih0"], params["bhh0"])
    h_l1 = run_layer(h_l0, params["wih1"], params["whh1"],
                     params["bih1"], params["bhh1"])
    dec = h_l1 @ params["wdec"].T + params["bdec"]
    scores = jax.nn.log_softmax(dec, axis=-1)
    return scores, dec


def make_params(key, in_dim, hidden_dim, out_dim):
    """Deterministic parameter init (shapes match nn.LSTM(n_layer=2) + Linear)."""
    H = hidden_dim
    ks = jax.random.split(key, 10)
    s = 1.0 / np.sqrt(H)
    u = lambda k, shape: jax.random.uniform(k, shape, jnp.float32, -s, s)
    return {
        "wih0": u(ks[0], (4 * H, in_dim)),
        "whh0": u(ks[1], (4 * H, H)),
        "bih0": u(ks[2], (4 * H,)),
        "bhh0": u(ks[3], (4 * H,)),
        "wih1": u(ks[4], (4 * H, H)),
        "whh1": u(ks[5], (4 * H, H)),
        "bih1": u(ks[6], (4 * H,)),
        "bhh1": u(ks[7], (4 * H,)),
        "wdec": u(ks[8], (out_dim, H)),
        "bdec": u(ks[9], (out_dim,)),
    }


if __name__ == "__main__":
    T, in_dim, hidden_dim, out_dim = 8, 16, 32, 2

    key = jax.random.PRNGKey(0)
    k_x, k_p = jax.random.split(key)
    x = jax.random.normal(k_x, (T, in_dim), jnp.float32)
    params = make_params(k_p, in_dim, hidden_dim, out_dim)

    scores, dec = jax.block_until_ready(lstm_prune_forward(x, params))
    scores_ref, dec_ref = _ref_forward(x, params)

    np.testing.assert_allclose(np.asarray(dec), np.asarray(dec_ref),
                               rtol=1e-5, atol=1e-5)
    np.testing.assert_allclose(np.asarray(scores), np.asarray(scores_ref),
                               rtol=1e-5, atol=1e-5)
    print("KERNEL_OK")
</pallas_src>

<mosaic_0001>
module attributes {stable_mosaic.version = 11 : i64} {
  func.func @_lstm_prune_kernel(%arg0: memref<8x16xf32, #tpu.memory_space<vmem>>, %arg1: memref<16x128xf32, #tpu.memory_space<vmem>>, %arg2: memref<1x128xf32, #tpu.memory_space<vmem>>, %arg3: memref<32x128xf32, #tpu.memory_space<vmem>>, %arg4: memref<64x128xf32, #tpu.memory_space<vmem>>, %arg5: memref<1x128xf32, #tpu.memory_space<vmem>>, %arg6: memref<32x2xf32, #tpu.memory_space<vmem>>, %arg7: memref<1x2xf32, #tpu.memory_space<vmem>>, %arg8: memref<8x2xf32, #tpu.memory_space<vmem>>, %arg9: memref<8x2xf32, #tpu.memory_space<vmem>>, %arg10: memref<8x128xf32, #tpu.memory_space<vmem>>, %arg11: memref<8x32xf32, #tpu.memory_space<vmem>>) attributes {dimension_semantics = [], scalar_prefetch = 0 : i64, scratch_operands = 2 : i64, tpu.core_type = #tpu.core_type<tc>} {
    %c0 = arith.constant 0 : index
    %c0_0 = arith.constant 0 : index
    %0 = vector.load %arg0[%c0, %c0_0] : memref<8x16xf32, #tpu.memory_space<vmem>>, vector<8x16xf32>
    %c0_1 = arith.constant 0 : index
    %c0_2 = arith.constant 0 : index
    %1 = vector.load %arg1[%c0_1, %c0_2] : memref<16x128xf32, #tpu.memory_space<vmem>>, vector<16x128xf32>
    %cst = arith.constant dense<0.000000e+00> : vector<8x128xf32>
    %2 = tpu.matmul %0, %1, %cst {dimension_numbers = #tpu.dot_dimension_numbers<[1], [0], [0], [1], [0, 0, 1, 1], [], []>} : vector<8x16xf32>, vector<16x128xf32>, vector<8x128xf32> -> vector<8x128xf32>
    %c0_3 = arith.constant 0 : index
    %c0_4 = arith.constant 0 : index
    %3 = vector.load %arg2[%c0_3, %c0_4] : memref<1x128xf32, #tpu.memory_space<vmem>>, vector<1x128xf32>
    %4 = vector.broadcast %3 : vector<1x128xf32> to vector<8x128xf32>
    %5 = arith.addf %2, %4 : vector<8x128xf32>
    %c0_5 = arith.constant 0 : index
    %c0_6 = arith.constant 0 : index
    %6 = vector.load %arg10[%c0_5, %c0_6] : memref<8x128xf32, #tpu.memory_space<vmem>>, vector<8x128xf32>
    tpu.vector_store %arg10[%c0_5, %c0_6], %5 {strides = array<i32>} : memref<8x128xf32, #tpu.memory_space<vmem>>, vector<8x128xf32>,
    %c0_7 = arith.constant 0 : index
    %c0_8 = arith.constant 0 : index
    %7 = vector.load %arg3[%c0_7, %c0_8] : memref<32x128xf32, #tpu.memory_space<vmem>>, vector<32x128xf32>
    %c0_9 = arith.constant 0 : index
    %c0_10 = arith.constant 0 : index
    %8 = vector.load %arg4[%c0_9, %c0_10] : memref<64x128xf32, #tpu.memory_space<vmem>>, vector<64x128xf32>
    %c0_11 = arith.constant 0 : index
    %c0_12 = arith.constant 0 : index
    %9 = vector.load %arg5[%c0_11, %c0_12] : memref<1x128xf32, #tpu.memory_space<vmem>>, vector<1x128xf32>
    %10 = tpu.iota {dimensions = array<i32: 1>} : vector<1x128xi32>
    %c64_i32 = arith.constant 64 : i32
    %11 = vector.broadcast %c64_i32 : i32 to vector<1x128xi32>
    %12 = arith.cmpi sge, %10, %11 : vector<1x128xi32>
    %c96_i32 = arith.constant 96 : i32
    %13 = vector.broadcast %c96_i32 : i32 to vector<1x128xi32>
    %14 = arith.cmpi slt, %10, %13 : vector<1x128xi32>
    %15 = arith.andi %12, %14 : vector<1x128xi1>
    %cst_13 = arith.constant 0.000000e+00 : f32
    %16 = vector.broadcast %cst_13 : f32 to vector<1x32xf32>
    %c0_i32 = arith.constant 0 : i32
    %17 = arith.index_cast %c0_i32 : i32 to index
    %c0_14 = arith.constant 0 : index
    %18 = vector.load %arg10[%17, %c0_14] : memref<8x128xf32, #tpu.memory_space<vmem>>, vector<1x128xf32>
    %cst_15 = arith.constant dense<0.000000e+00> : vector<1x128xf32>
    %19 = tpu.matmul %16, %7, %cst_15 {dimension_numbers = #tpu.dot_dimension_numbers<[1], [0], [0], [1], [0, 0, 1, 1], [], []>} : vector<1x32xf32>, vector<32x128xf32>, vector<1x128xf32> -> vector<1x128xf32>
    %20 = arith.addf %18, %19 : vector<1x128xf32>
    %21 = math.tanh %20 : vector<1x128xf32>
    %22 = arith.negf %20 : vector<1x128xf32>
    %23 = math.exp %22 : vector<1x128xf32>
    %cst_16 = arith.constant 1.000000e+00 : f32
    %24 = vector.broadcast %cst_16 : f32 to vector<1x128xf32>
    %25 = arith.addf %24, %23 : vector<1x128xf32>
    %26 = arith.divf %24, %25 : vector<1x128xf32>
    %27 = arith.select %15, %21, %26 : vector<1x128xi1>, vector<1x128xf32>
    %28 = vector.extract_strided_slice %27 {offsets = [0, 0], sizes = [1, 32], strides = [1, 1]} : vector<1x128xf32> to vector<1x32xf32>
    %29 = vector.extract_strided_slice %27 {offsets = [0, 32], sizes = [1, 32], strides = [1, 1]} : vector<1x128xf32> to vector<1x32xf32>
    %30 = vector.extract_strided_slice %27 {offsets = [0, 64], sizes = [1, 32], strides = [1, 1]} : vector<1x128xf32> to vector<1x32xf32>
    %31 = vector.extract_strided_slice %27 {offsets = [0, 96], sizes = [1, 32], strides = [1, 1]} : vector<1x128xf32> to vector<1x32xf32>
    %32 = arith.mulf %29, %16 : vector<1x32xf32>
    %33 = arith.mulf %28, %30 : vector<1x32xf32>
    %34 = arith.addf %32, %33 : vector<1x32xf32>
    %35 = math.tanh %34 : vector<1x32xf32>
    %36 = arith.mulf %31, %35 : vector<1x32xf32>
    %37 = tpu.concatenate %36, %16 in 1 : vector<1x32xf32>, vector<1x32xf32> -> vector<1x64xf32>
    %cst_17 = arith.constant dense<0.000000e+00> : vector<1x128xf32>
    %38 = tpu.matmul %37, %8, %cst_17 {dimension_numbers = #tpu.dot_dimension_numbers<[1], [0], [0], [1], [0, 0, 1, 1], [], []>} : vector<1x64xf32>, vector<64x128xf32>, vector<1x128xf32> -> vector<1x128xf32>
    %39 = arith.addf %38, %9 : vector<1x128xf32>
    %40 = math.tanh %39 : vector<1x128xf32>
    %41 = arith.negf %39 : vector<1x128xf32>
    %42 = math.exp %41 : vector<1x128xf32>
    %cst_18 = arith.constant 1.000000e+00 : f32
    %43 = vector.broadcast %cst_18 : f32 to vector<1x128xf32>
    %44 = arith.addf %43, %42 : vector<1x128xf32>
    %45 = arith.divf %43, %44 : vector<1x128xf32>
    %46 = arith.select %15, %40, %45 : vector<1x128xi1>, vector<1x128xf32>
    %47 = vector.extract_strided_slice %46 {offsets = [0, 0], sizes = [1, 32], strides = [1, 1]} : vector<1x128xf32> to vector<1x32xf32>
    %48 = vector.extract_strided_slice %46 {offsets = [0, 32], sizes = [1, 32], strides = [1, 1]} : vector<1x128xf32> to vector<1x32xf32>
    %49 = vector.extract_strided_slice %46 {offsets = [0, 64], sizes = [1, 32], strides = [1, 1]} : vector<1x128xf32> to vector<1x32xf32>
    %50 = vector.extract_strided_slice %46 {offsets = [0, 96], sizes = [1, 32], strides = [1, 1]} : vector<1x128xf32> to vector<1x32xf32>
    %51 = arith.mulf %48, %16 : vector<1x32xf32>
    %52 = arith.mulf %47, %49 : vector<1x32xf32>
    %53 = arith.addf %51, %52 : vector<1x32xf32>
    %54 = math.tanh %53 : vector<1x32xf32>
    %55 = arith.mulf %50, %54 : vector<1x32xf32>
    %56 = arith.index_cast %c0_i32 : i32 to index
    %c0_19 = arith.constant 0 : index
    %57 = vector.load %arg11[%56, %c0_19] : memref<8x32xf32, #tpu.memory_space<vmem>>, vector<1x32xf32>
    tpu.vector_store %arg11[%56, %c0_19], %55 {strides = array<i32>} : memref<8x32xf32, #tpu.memory_space<vmem>>, vector<1x32xf32>,
    %c1_i32 = arith.constant 1 : i32
    %58 = arith.index_cast %c1_i32 : i32 to index
    %c0_20 = arith.constant 0 : index
    %59 = vector.load %arg10[%58, %c0_20] : memref<8x128xf32, #tpu.memory_space<vmem>>, vector<1x128xf32>
    %cst_21 = arith.constant dense<0.000000e+00> : vector<1x128xf32>
    %60 = tpu.matmul %36, %7, %cst_21 {dimension_numbers = #tpu.dot_dimension_numbers<[1], [0], [0], [1], [0, 0, 1, 1], [], []>} : vector<1x32xf32>, vector<32x128xf32>, vector<1x128xf32> -> vector<1x128xf32>
    %61 = arith.addf %59, %60 : vector<1x128xf32>
    %62 = math.tanh %61 : vector<1x128xf32>
    %63 = arith.negf %61 : vector<1x128xf32>
    %64 = math.exp %63 : vector<1x128xf32>
    %cst_22 = arith.constant 1.000000e+00 : f32
    %65 = vector.broadcast %cst_22 : f32 to vector<1x128xf32>
    %66 = arith.addf %65, %64 : vector<1x128xf32>
    %67 = arith.divf %65, %66 : vector<1x128xf32>
    %68 = arith.select %15, %62, %67 : vector<1x128xi1>, vector<1x128xf32>
    %69 = vector.extract_strided_slice %68 {offsets = [0, 0], sizes = [1, 32], strides = [1, 1]} : vector<1x128xf32> to vector<1x32xf32>
    %70 = vector.extract_strided_slice %68 {offsets = [0, 32], sizes = [1, 32], strides = [1, 1]} : vector<1x128xf32> to vector<1x32xf32>
    %71 = vector.extract_strided_slice %68 {offsets = [0, 64], sizes = [1, 32], strides = [1, 1]} : vector<1x128xf32> to vector<1x32xf32>
    %72 = vector.extract_strided_slice %68 {offsets = [0, 96], sizes = [1, 32], strides = [1, 1]} : vector<1x128xf32> to vector<1x32xf32>
    %73 = arith.mulf %70, %34 : vector<1x32xf32>
    %74 = arith.mulf %69, %71 : vector<1x32xf32>
    %75 = arith.addf %73, %74 : vector<1x32xf32>
    %76 = math.tanh %75 : vector<1x32xf32>
    %77 = arith.mulf %72, %76 : vector<1x32xf32>
    %78 = tpu.concatenate %77, %55 in 1 : vector<1x32xf32>, vector<1x32xf32> -> vector<1x64xf32>
    %cst_23 = arith.constant dense<0.000000e+00> : vector<1x128xf32>
    %79 = tpu.matmul %78, %8, %cst_23 {dimension_numbers = #tpu.dot_dimension_numbers<[1], [0], [0], [1], [0, 0, 1, 1], [], []>} : vector<1x64xf32>, vector<64x128xf32>, vector<1x128xf32> -> vector<1x128xf32>
    %80 = arith.addf %79, %9 : vector<1x128xf32>
    %81 = math.tanh %80 : vector<1x128xf32>
    %82 = arith.negf %80 : vector<1x128xf32>
    %83 = math.exp %82 : vector<1x128xf32>
    %cst_24 = arith.constant 1.000000e+00 : f32
    %84 = vector.broadcast %cst_24 : f32 to vector<1x128xf32>
    %85 = arith.addf %84, %83 : vector<1x128xf32>
    %86 = arith.divf %84, %85 : vector<1x128xf32>
    %87 = arith.select %15, %81, %86 : vector<1x128xi1>, vector<1x128xf32>
    %88 = vector.extract_strided_slice %87 {offsets = [0, 0], sizes = [1, 32], strides = [1, 1]} : vector<1x128xf32> to vector<1x32xf32>
    %89 = vector.extract_strided_slice %87 {offsets = [0, 32], sizes = [1, 32], strides = [1, 1]} : vector<1x128xf32> to vector<1x32xf32>
    %90 = vector.extract_strided_slice %87 {offsets = [0, 64], sizes = [1, 32], strides = [1, 1]} : vector<1x128xf32> to vector<1x32xf32>
    %91 = vector.extract_strided_slice %87 {offsets = [0, 96], sizes = [1, 32], strides = [1, 1]} : vector<1x128xf32> to vector<1x32xf32>
    %92 = arith.mulf %89, %53 : vector<1x32xf32>
    %93 = arith.mulf %88, %90 : vector<1x32xf32>
    %94 = arith.addf %92, %93 : vector<1x32xf32>
    %95 = math.tanh %94 : vector<1x32xf32>
    %96 = arith.mulf %91, %95 : vector<1x32xf32>
    %97 = arith.index_cast %c1_i32 : i32 to index
    %c0_25 = arith.constant 0 : index
    %98 = vector.load %arg11[%97, %c0_25] : memref<8x32xf32, #tpu.memory_space<vmem>>, vector<1x32xf32>
    tpu.vector_store %arg11[%97, %c0_25], %96 {strides = array<i32>} : memref<8x32xf32, #tpu.memory_space<vmem>>, vector<1x32xf32>,
    %c2_i32 = arith.constant 2 : i32
    %99 = arith.index_cast %c2_i32 : i32 to index
    %c0_26 = arith.constant 0 : index
    %100 = vector.load %arg10[%99, %c0_26] : memref<8x128xf32, #tpu.memory_space<vmem>>, vector<1x128xf32>
    %cst_27 = arith.constant dense<0.000000e+00> : vector<1x128xf32>
    %101 = tpu.matmul %77, %7, %cst_27 {dimension_numbers = #tpu.dot_dimension_numbers<[1], [0], [0], [1], [0, 0, 1, 1], [], []>} : vector<1x32xf32>, vector<32x128xf32>, vector<1x128xf32> -> vector<1x128xf32>
    %102 = arith.addf %100, %101 : vector<1x128xf32>
    %103 = math.tanh %102 : vector<1x128xf32>
    %104 = arith.negf %102 : vector<1x128xf32>
    %105 = math.exp %104 : vector<1x128xf32>
    %cst_28 = arith.constant 1.000000e+00 : f32
    %106 = vector.broadcast %cst_28 : f32 to vector<1x128xf32>
    %107 = arith.addf %106, %105 : vector<1x128xf32>
    %108 = arith.divf %106, %107 : vector<1x128xf32>
    %109 = arith.select %15, %103, %108 : vector<1x128xi1>, vector<1x128xf32>
    %110 = vector.extract_strided_slice %109 {offsets = [0, 0], sizes = [1, 32], strides = [1, 1]} : vector<1x128xf32> to vector<1x32xf32>
    %111 = vector.extract_strided_slice %109 {offsets = [0, 32], sizes = [1, 32], strides = [1, 1]} : vector<1x128xf32> to vector<1x32xf32>
    %112 = vector.extract_strided_slice %109 {offsets = [0, 64], sizes = [1, 32], strides = [1, 1]} : vector<1x128xf32> to vector<1x32xf32>
    %113 = vector.extract_strided_slice %109 {offsets = [0, 96], sizes = [1, 32], strides = [1, 1]} : vector<1x128xf32> to vector<1x32xf32>
    %114 = arith.mulf %111, %75 : vector<1x32xf32>
    %115 = arith.mulf %110, %112 : vector<1x32xf32>
    %116 = arith.addf %114, %115 : vector<1x32xf32>
    %117 = math.tanh %116 : vector<1x32xf32>
    %118 = arith.mulf %113, %117 : vector<1x32xf32>
    %119 = tpu.concatenate %118, %96 in 1 : vector<1x32xf32>, vector<1x32xf32> -> vector<1x64xf32>
    %cst_29 = arith.constant dense<0.000000e+00> : vector<1x128xf32>
    %120 = tpu.matmul %119, %8, %cst_29 {dimension_numbers = #tpu.dot_dimension_numbers<[1], [0], [0], [1], [0, 0, 1, 1], [], []>} : vector<1x64xf32>, vector<64x128xf32>, vector<1x128xf32> -> vector<1x128xf32>
    %121 = arith.addf %120, %9 : vector<1x128xf32>
    %122 = math.tanh %121 : vector<1x128xf32>
    %123 = arith.negf %121 : vector<1x128xf32>
    %124 = math.exp %123 : vector<1x128xf32>
    %cst_30 = arith.constant 1.000000e+00 : f32
    %125 = vector.broadcast %cst_30 : f32 to vector<1x128xf32>
    %126 = arith.addf %125, %124 : vector<1x128xf32>
    %127 = arith.divf %125, %126 : vector<1x128xf32>
    %128 = arith.select %15, %122, %127 : vector<1x128xi1>, vector<1x128xf32>
    %129 = vector.extract_strided_slice %128 {offsets = [0, 0], sizes = [1, 32], strides = [1, 1]} : vector<1x128xf32> to vector<1x32xf32>
    %130 = vector.extract_strided_slice %128 {offsets = [0, 32], sizes = [1, 32], strides = [1, 1]} : vector<1x128xf32> to vector<1x32xf32>
    %131 = vector.extract_strided_slice %128 {offsets = [0, 64], sizes = [1, 32], strides = [1, 1]} : vector<1x128xf32> to vector<1x32xf32>
    %132 = vector.extract_strided_slice %128 {offsets = [0, 96], sizes = [1, 32], strides = [1, 1]} : vector<1x128xf32> to vector<1x32xf32>
    %133 = arith.mulf %130, %94 : vector<1x32xf32>
    %134 = arith.mulf %129, %131 : vector<1x32xf32>
    %135 = arith.addf %133, %134 : vector<1x32xf32>
    %136 = math.tanh %135 : vector<1x32xf32>
    %137 = arith.mulf %132, %136 : vector<1x32xf32>
    %138 = arith.index_cast %c2_i32 : i32 to index
    %c0_31 = arith.constant 0 : index
    %139 = vector.load %arg11[%138, %c0_31] : memref<8x32xf32, #tpu.memory_space<vmem>>, vector<1x32xf32>
    tpu.vector_store %arg11[%138, %c0_31], %137 {strides = array<i32>} : memref<8x32xf32, #tpu.memory_space<vmem>>, vector<1x32xf32>,
    %c3_i32 = arith.constant 3 : i32
    %140 = arith.index_cast %c3_i32 : i32 to index
    %c0_32 = arith.constant 0 : index
    %141 = vector.load %arg10[%140, %c0_32] : memref<8x128xf32, #tpu.memory_space<vmem>>, vector<1x128xf32>
    %cst_33 = arith.constant dense<0.000000e+00> : vector<1x128xf32>
    %142 = tpu.matmul %118, %7, %cst_33 {dimension_numbers = #tpu.dot_dimension_numbers<[1], [0], [0], [1], [0, 0, 1, 1], [], []>} : vector<1x32xf32>, vector<32x128xf32>, vector<1x128xf32> -> vector<1x128xf32>
    %143 = arith.addf %141, %142 : vector<1x128xf32>
    %144 = math.tanh %143 : vector<1x128xf32>
    %145 = arith.negf %143 : vector<1x128xf32>
    %146 = math.exp %145 : vector<1x128xf32>
    %cst_34 = arith.constant 1.000000e+00 : f32
    %147 = vector.broadcast %cst_34 : f32 to vector<1x128xf32>
    %148 = arith.addf %147, %146 : vector<1x128xf32>
    %149 = arith.divf %147, %148 : vector<1x128xf32>
    %150 = arith.select %15, %144, %149 : vector<1x128xi1>, vector<1x128xf32>
    %151 = vector.extract_strided_slice %150 {offsets = [0, 0], sizes = [1, 32], strides = [1, 1]} : vector<1x128xf32> to vector<1x32xf32>
    %152 = vector.extract_strided_slice %150 {offsets = [0, 32], sizes = [1, 32], strides = [1, 1]} : vector<1x128xf32> to vector<1x32xf32>
    %153 = vector.extract_strided_slice %150 {offsets = [0, 64], sizes = [1, 32], strides = [1, 1]} : vector<1x128xf32> to vector<1x32xf32>
    %154 = vector.extract_strided_slice %150 {offsets = [0, 96], sizes = [1, 32], strides = [1, 1]} : vector<1x128xf32> to vector<1x32xf32>
    %155 = arith.mulf %152, %116 : vector<1x32xf32>
    %156 = arith.mulf %151, %153 : vector<1x32xf32>
    %157 = arith.addf %155, %156 : vector<1x32xf32>
    %158 = math.tanh %157 : vector<1x32xf32>
    %159 = arith.mulf %154, %158 : vector<1x32xf32>
    %160 = tpu.concatenate %159, %137 in 1 : vector<1x32xf32>, vector<1x32xf32> -> vector<1x64xf32>
    %cst_35 = arith.constant dense<0.000000e+00> : vector<1x128xf32>
    %161 = tpu.matmul %160, %8, %cst_35 {dimension_numbers = #tpu.dot_dimension_numbers<[1], [0], [0], [1], [0, 0, 1, 1], [], []>} : vector<1x64xf32>, vector<64x128xf32>, vector<1x128xf32> -> vector<1x128xf32>
    %162 = arith.addf %161, %9 : vector<1x128xf32>
    %163 = math.tanh %162 : vector<1x128xf32>
    %164 = arith.negf %162 : vector<1x128xf32>
    %165 = math.exp %164 : vector<1x128xf32>
    %cst_36 = arith.constant 1.000000e+00 : f32
    %166 = vector.broadcast %cst_36 : f32 to vector<1x128xf32>
    %167 = arith.addf %166, %165 : vector<1x128xf32>
    %168 = arith.divf %166, %167 : vector<1x128xf32>
    %169 = arith.select %15, %163, %168 : vector<1x128xi1>, vector<1x128xf32>
    %170 = vector.extract_strided_slice %169 {offsets = [0, 0], sizes = [1, 32], strides = [1, 1]} : vector<1x128xf32> to vector<1x32xf32>
    %171 = vector.extract_strided_slice %169 {offsets = [0, 32], sizes = [1, 32], strides = [1, 1]} : vector<1x128xf32> to vector<1x32xf32>
    %172 = vector.extract_strided_slice %169 {offsets = [0, 64], sizes = [1, 32], strides = [1, 1]} : vector<1x128xf32> to vector<1x32xf32>
    %173 = vector.extract_strided_slice %169 {offsets = [0, 96], sizes = [1, 32], strides = [1, 1]} : vector<1x128xf32> to vector<1x32xf32>
    %174 = arith.mulf %171, %135 : vector<1x32xf32>
    %175 = arith.mulf %170, %172 : vector<1x32xf32>
    %176 = arith.addf %174, %175 : vector<1x32xf32>
    %177 = math.tanh %176 : vector<1x32xf32>
    %178 = arith.mulf %173, %177 : vector<1x32xf32>
    %179 = arith.index_cast %c3_i32 : i32 to index
    %c0_37 = arith.constant 0 : index
    %180 = vector.load %arg11[%179, %c0_37] : memref<8x32xf32, #tpu.memory_space<vmem>>, vector<1x32xf32>
    tpu.vector_store %arg11[%179, %c0_37], %178 {strides = array<i32>} : memref<8x32xf32, #tpu.memory_space<vmem>>, vector<1x32xf32>,
    %c4_i32 = arith.constant 4 : i32
    %181 = arith.index_cast %c4_i32 : i32 to index
    %c0_38 = arith.constant 0 : index
    %182 = vector.load %arg10[%181, %c0_38] : memref<8x128xf32, #tpu.memory_space<vmem>>, vector<1x128xf32>
    %cst_39 = arith.constant dense<0.000000e+00> : vector<1x128xf32>
    %183 = tpu.matmul %159, %7, %cst_39 {dimension_numbers = #tpu.dot_dimension_numbers<[1], [0], [0], [1], [0, 0, 1, 1], [], []>} : vector<1x32xf32>, vector<32x128xf32>, vector<1x128xf32> -> vector<1x128xf32>
    %184 = arith.addf %182, %183 : vector<1x128xf32>
    %185 = math.tanh %184 : vector<1x128xf32>
    %186 = arith.negf %184 : vector<1x128xf32>
    %187 = math.exp %186 : vector<1x128xf32>
    %cst_40 = arith.constant 1.000000e+00 : f32
    %188 = vector.broadcast %cst_40 : f32 to vector<1x128xf32>
    %189 = arith.addf %188, %187 : vector<1x128xf32>
    %190 = arith.divf %188, %189 : vector<1x128xf32>
    %191 = arith.select %15, %185, %190 : vector<1x128xi1>, vector<1x128xf32>
    %192 = vector.extract_strided_slice %191 {offsets = [0, 0], sizes = [1, 32], strides = [1, 1]} : vector<1x128xf32> to vector<1x32xf32>
    %193 = vector.extract_strided_slice %191 {offsets = [0, 32], sizes = [1, 32], strides = [1, 1]} : vector<1x128xf32> to vector<1x32xf32>
    %194 = vector.extract_strided_slice %191 {offsets = [0, 64], sizes = [1, 32], strides = [1, 1]} : vector<1x128xf32> to vector<1x32xf32>
    %195 = vector.extract_strided_slice %191 {offsets = [0, 96], sizes = [1, 32], strides = [1, 1]} : vector<1x128xf32> to vector<1x32xf32>
    %196 = arith.mulf %193, %157 : vector<1x32xf32>
    %197 = arith.mulf %192, %194 : vector<1x32xf32>
    %198 = arith.addf %196, %197 : vector<1x32xf32>
    %199 = math.tanh %198 : vector<1x32xf32>
    %200 = arith.mulf %195, %199 : vector<1x32xf32>
    %201 = tpu.concatenate %200, %178 in 1 : vector<1x32xf32>, vector<1x32xf32> -> vector<1x64xf32>
    %cst_41 = arith.constant dense<0.000000e+00> : vector<1x128xf32>
    %202 = tpu.matmul %201, %8, %cst_41 {dimension_numbers = #tpu.dot_dimension_numbers<[1], [0], [0], [1], [0, 0, 1, 1], [], []>} : vector<1x64xf32>, vector<64x128xf32>, vector<1x128xf32> -> vector<1x128xf32>
    %203 = arith.addf %202, %9 : vector<1x128xf32>
    %204 = math.tanh %203 : vector<1x128xf32>
    %205 = arith.negf %203 : vector<1x128xf32>
    %206 = math.exp %205 : vector<1x128xf32>
    %cst_42 = arith.constant 1.000000e+00 : f32
    %207 = vector.broadcast %cst_42 : f32 to vector<1x128xf32>
    %208 = arith.addf %207, %206 : vector<1x128xf32>
    %209 = arith.divf %207, %208 : vector<1x128xf32>
    %210 = arith.select %15, %204, %209 : vector<1x128xi1>, vector<1x128xf32>
    %211 = vector.extract_strided_slice %210 {offsets = [0, 0], sizes = [1, 32], strides = [1, 1]} : vector<1x128xf32> to vector<1x32xf32>
    %212 = vector.extract_strided_slice %210 {offsets = [0, 32], sizes = [1, 32], strides = [1, 1]} : vector<1x128xf32> to vector<1x32xf32>
    %213 = vector.extract_strided_slice %210 {offsets = [0, 64], sizes = [1, 32], strides = [1, 1]} : vector<1x128xf32> to vector<1x32xf32>
    %214 = vector.extract_strided_slice %210 {offsets = [0, 96], sizes = [1, 32], strides = [1, 1]} : vector<1x128xf32> to vector<1x32xf32>
    %215 = arith.mulf %212, %176 : vector<1x32xf32>
    %216 = arith.mulf %211, %213 : vector<1x32xf32>
    %217 = arith.addf %215, %216 : vector<1x32xf32>
    %218 = math.tanh %217 : vector<1x32xf32>
    %219 = arith.mulf %214, %218 : vector<1x32xf32>
    %220 = arith.index_cast %c4_i32 : i32 to index
    %c0_43 = arith.constant 0 : index
    %221 = vector.load %arg11[%220, %c0_43] : memref<8x32xf32, #tpu.memory_space<vmem>>, vector<1x32xf32>
    tpu.vector_store %arg11[%220, %c0_43], %219 {strides = array<i32>} : memref<8x32xf32, #tpu.memory_space<vmem>>, vector<1x32xf32>,
    %c5_i32 = arith.constant 5 : i32
    %222 = arith.index_cast %c5_i32 : i32 to index
    %c0_44 = arith.constant 0 : index
    %223 = vector.load %arg10[%222, %c0_44] : memref<8x128xf32, #tpu.memory_space<vmem>>, vector<1x128xf32>
    %cst_45 = arith.constant dense<0.000000e+00> : vector<1x128xf32>
    %224 = tpu.matmul %200, %7, %cst_45 {dimension_numbers = #tpu.dot_dimension_numbers<[1], [0], [0], [1], [0, 0, 1, 1], [], []>} : vector<1x32xf32>, vector<32x128xf32>, vector<1x128xf32> -> vector<1x128xf32>
    %225 = arith.addf %223, %224 : vector<1x128xf32>
    %226 = math.tanh %225 : vector<1x128xf32>
    %227 = arith.negf %225 : vector<1x128xf32>
    %228 = math.exp %227 : vector<1x128xf32>
    %cst_46 = arith.constant 1.000000e+00 : f32
    %229 = vector.broadcast %cst_46 : f32 to vector<1x128xf32>
    %230 = arith.addf %229, %228 : vector<1x128xf32>
    %231 = arith.divf %229, %230 : vector<1x128xf32>
    %232 = arith.select %15, %226, %231 : vector<1x128xi1>, vector<1x128xf32>
    %233 = vector.extract_strided_slice %232 {offsets = [0, 0], sizes = [1, 32], strides = [1, 1]} : vector<1x128xf32> to vector<1x32xf32>
    %234 = vector.extract_strided_slice %232 {offsets = [0, 32], sizes = [1, 32], strides = [1, 1]} : vector<1x128xf32> to vector<1x32xf32>
    %235 = vector.extract_strided_slice %232 {offsets = [0, 64], sizes = [1, 32], strides = [1, 1]} : vector<1x128xf32> to vector<1x32xf32>
    %236 = vector.extract_strided_slice %232 {offsets = [0, 96], sizes = [1, 32], strides = [1, 1]} : vector<1x128xf32> to vector<1x32xf32>
    %237 = arith.mulf %234, %198 : vector<1x32xf32>
    %238 = arith.mulf %233, %235 : vector<1x32xf32>
    %239 = arith.addf %237, %238 : vector<1x32xf32>
    %240 = math.tanh %239 : vector<1x32xf32>
    %241 = arith.mulf %236, %240 : vector<1x32xf32>
    %242 = tpu.concatenate %241, %219 in 1 : vector<1x32xf32>, vector<1x32xf32> -> vector<1x64xf32>
    %cst_47 = arith.constant dense<0.000000e+00> : vector<1x128xf32>
    %243 = tpu.matmul %242, %8, %cst_47 {dimension_numbers = #tpu.dot_dimension_numbers<[1], [0], [0], [1], [0, 0, 1, 1], [], []>} : vector<1x64xf32>, vector<64x128xf32>, vector<1x128xf32> -> vector<1x128xf32>
    %244 = arith.addf %243, %9 : vector<1x128xf32>
    %245 = math.tanh %244 : vector<1x128xf32>
    %246 = arith.negf %244 : vector<1x128xf32>
    %247 = math.exp %246 : vector<1x128xf32>
    %cst_48 = arith.constant 1.000000e+00 : f32
    %248 = vector.broadcast %cst_48 : f32 to vector<1x128xf32>
    %249 = arith.addf %248, %247 : vector<1x128xf32>
    %250 = arith.divf %248, %249 : vector<1x128xf32>
    %251 = arith.select %15, %245, %250 : vector<1x128xi1>, vector<1x128xf32>
    %252 = vector.extract_strided_slice %251 {offsets = [0, 0], sizes = [1, 32], strides = [1, 1]} : vector<1x128xf32> to vector<1x32xf32>
    %253 = vector.extract_strided_slice %251 {offsets = [0, 32], sizes = [1, 32], strides = [1, 1]} : vector<1x128xf32> to vector<1x32xf32>
    %254 = vector.extract_strided_slice %251 {offsets = [0, 64], sizes = [1, 32], strides = [1, 1]} : vector<1x128xf32> to vector<1x32xf32>
    %255 = vector.extract_strided_slice %251 {offsets = [0, 96], sizes = [1, 32], strides = [1, 1]} : vector<1x128xf32> to vector<1x32xf32>
    %256 = arith.mulf %253, %217 : vector<1x32xf32>
    %257 = arith.mulf %252, %254 : vector<1x32xf32>
    %258 = arith.addf %256, %257 : vector<1x32xf32>
    %259 = math.tanh %258 : vector<1x32xf32>
    %260 = arith.mulf %255, %259 : vector<1x32xf32>
    %261 = arith.index_cast %c5_i32 : i32 to index
    %c0_49 = arith.constant 0 : index
    %262 = vector.load %arg11[%261, %c0_49] : memref<8x32xf32, #tpu.memory_space<vmem>>, vector<1x32xf32>
    tpu.vector_store %arg11[%261, %c0_49], %260 {strides = array<i32>} : memref<8x32xf32, #tpu.memory_space<vmem>>, vector<1x32xf32>,
    %c6_i32 = arith.constant 6 : i32
    %263 = arith.index_cast %c6_i32 : i32 to index
    %c0_50 = arith.constant 0 : index
    %264 = vector.load %arg10[%263, %c0_50] : memref<8x128xf32, #tpu.memory_space<vmem>>, vector<1x128xf32>
    %cst_51 = arith.constant dense<0.000000e+00> : vector<1x128xf32>
    %265 = tpu.matmul %241, %7, %cst_51 {dimension_numbers = #tpu.dot_dimension_numbers<[1], [0], [0], [1], [0, 0, 1, 1], [], []>} : vector<1x32xf32>, vector<32x128xf32>, vector<1x128xf32> -> vector<1x128xf32>
    %266 = arith.addf %264, %265 : vector<1x128xf32>
    %267 = math.tanh %266 : vector<1x128xf32>
    %268 = arith.negf %266 : vector<1x128xf32>
    %269 = math.exp %268 : vector<1x128xf32>
    %cst_52 = arith.constant 1.000000e+00 : f32
    %270 = vector.broadcast %cst_52 : f32 to vector<1x128xf32>
    %271 = arith.addf %270, %269 : vector<1x128xf32>
    %272 = arith.divf %270, %271 : vector<1x128xf32>
    %273 = arith.select %15, %267, %272 : vector<1x128xi1>, vector<1x128xf32>
    %274 = vector.extract_strided_slice %273 {offsets = [0, 0], sizes = [1, 32], strides = [1, 1]} : vector<1x128xf32> to vector<1x32xf32>
    %275 = vector.extract_strided_slice %273 {offsets = [0, 32], sizes = [1, 32], strides = [1, 1]} : vector<1x128xf32> to vector<1x32xf32>
    %276 = vector.extract_strided_slice %273 {offsets = [0, 64], sizes = [1, 32], strides = [1, 1]} : vector<1x128xf32> to vector<1x32xf32>
    %277 = vector.extract_strided_slice %273 {offsets = [0, 96], sizes = [1, 32], strides = [1, 1]} : vector<1x128xf32> to vector<1x32xf32>
    %278 = arith.mulf %275, %239 : vector<1x32xf32>
    %279 = arith.mulf %274, %276 : vector<1x32xf32>
    %280 = arith.addf %278, %279 : vector<1x32xf32>
    %281 = math.tanh %280 : vector<1x32xf32>
    %282 = arith.mulf %277, %281 : vector<1x32xf32>
    %283 = tpu.concatenate %282, %260 in 1 : vector<1x32xf32>, vector<1x32xf32> -> vector<1x64xf32>
    %cst_53 = arith.constant dense<0.000000e+00> : vector<1x128xf32>
    %284 = tpu.matmul %283, %8, %cst_53 {dimension_numbers = #tpu.dot_dimension_numbers<[1], [0], [0], [1], [0, 0, 1, 1], [], []>} : vector<1x64xf32>, vector<64x128xf32>, vector<1x128xf32> -> vector<1x128xf32>
    %285 = arith.addf %284, %9 : vector<1x128xf32>
    %286 = math.tanh %285 : vector<1x128xf32>
    %287 = arith.negf %285 : vector<1x128xf32>
    %288 = math.exp %287 : vector<1x128xf32>
    %cst_54 = arith.constant 1.000000e+00 : f32
    %289 = vector.broadcast %cst_54 : f32 to vector<1x128xf32>
    %290 = arith.addf %289, %288 : vector<1x128xf32>
    %291 = arith.divf %289, %290 : vector<1x128xf32>
    %292 = arith.select %15, %286, %291 : vector<1x128xi1>, vector<1x128xf32>
    %293 = vector.extract_strided_slice %292 {offsets = [0, 0], sizes = [1, 32], strides = [1, 1]} : vector<1x128xf32> to vector<1x32xf32>
    %294 = vector.extract_strided_slice %292 {offsets = [0, 32], sizes = [1, 32], strides = [1, 1]} : vector<1x128xf32> to vector<1x32xf32>
    %295 = vector.extract_strided_slice %292 {offsets = [0, 64], sizes = [1, 32], strides = [1, 1]} : vector<1x128xf32> to vector<1x32xf32>
    %296 = vector.extract_strided_slice %292 {offsets = [0, 96], sizes = [1, 32], strides = [1, 1]} : vector<1x128xf32> to vector<1x32xf32>
    %297 = arith.mulf %294, %258 : vector<1x32xf32>
    %298 = arith.mulf %293, %295 : vector<1x32xf32>
    %299 = arith.addf %297, %298 : vector<1x32xf32>
    %300 = math.tanh %299 : vector<1x32xf32>
    %301 = arith.mulf %296, %300 : vector<1x32xf32>
    %302 = arith.index_cast %c6_i32 : i32 to index
    %c0_55 = arith.constant 0 : index
    %303 = vector.load %arg11[%302, %c0_55] : memref<8x32xf32, #tpu.memory_space<vmem>>, vector<1x32xf32>
    tpu.vector_store %arg11[%302, %c0_55], %301 {strides = array<i32>} : memref<8x32xf32, #tpu.memory_space<vmem>>, vector<1x32xf32>,
    %c7_i32 = arith.constant 7 : i32
    %304 = arith.index_cast %c7_i32 : i32 to index
    %c0_56 = arith.constant 0 : index
    %305 = vector.load %arg10[%304, %c0_56] : memref<8x128xf32, #tpu.memory_space<vmem>>, vector<1x128xf32>
    %cst_57 = arith.constant dense<0.000000e+00> : vector<1x128xf32>
    %306 = tpu.matmul %282, %7, %cst_57 {dimension_numbers = #tpu.dot_dimension_numbers<[1], [0], [0], [1], [0, 0, 1, 1], [], []>} : vector<1x32xf32>, vector<32x128xf32>, vector<1x128xf32> -> vector<1x128xf32>
    %307 = arith.addf %305, %306 : vector<1x128xf32>
    %308 = math.tanh %307 : vector<1x128xf32>
    %309 = arith.negf %307 : vector<1x128xf32>
    %310 = math.exp %309 : vector<1x128xf32>
    %cst_58 = arith.constant 1.000000e+00 : f32
    %311 = vector.broadcast %cst_58 : f32 to vector<1x128xf32>
    %312 = arith.addf %311, %310 : vector<1x128xf32>
    %313 = arith.divf %311, %312 : vector<1x128xf32>
    %314 = arith.select %15, %308, %313 : vector<1x128xi1>, vector<1x128xf32>
    %315 = vector.extract_strided_slice %314 {offsets = [0, 0], sizes = [1, 32], strides = [1, 1]} : vector<1x128xf32> to vector<1x32xf32>
    %316 = vector.extract_strided_slice %314 {offsets = [0, 32], sizes = [1, 32], strides = [1, 1]} : vector<1x128xf32> to vector<1x32xf32>
    %317 = vector.extract_strided_slice %314 {offsets = [0, 64], sizes = [1, 32], strides = [1, 1]} : vector<1x128xf32> to vector<1x32xf32>
    %318 = vector.extract_strided_slice %314 {offsets = [0, 96], sizes = [1, 32], strides = [1, 1]} : vector<1x128xf32> to vector<1x32xf32>
    %319 = arith.mulf %316, %280 : vector<1x32xf32>
    %320 = arith.mulf %315, %317 : vector<1x32xf32>
    %321 = arith.addf %319, %320 : vector<1x32xf32>
    %322 = math.tanh %321 : vector<1x32xf32>
    %323 = arith.mulf %318, %322 : vector<1x32xf32>
    %324 = tpu.concatenate %323, %301 in 1 : vector<1x32xf32>, vector<1x32xf32> -> vector<1x64xf32>
    %cst_59 = arith.constant dense<0.000000e+00> : vector<1x128xf32>
    %325 = tpu.matmul %324, %8, %cst_59 {dimension_numbers = #tpu.dot_dimension_numbers<[1], [0], [0], [1], [0, 0, 1, 1], [], []>} : vector<1x64xf32>, vector<64x128xf32>, vector<1x128xf32> -> vector<1x128xf32>
    %326 = arith.addf %325, %9 : vector<1x128xf32>
    %327 = math.tanh %326 : vector<1x128xf32>
    %328 = arith.negf %326 : vector<1x128xf32>
    %329 = math.exp %328 : vector<1x128xf32>
    %cst_60 = arith.constant 1.000000e+00 : f32
    %330 = vector.broadcast %cst_60 : f32 to vector<1x128xf32>
    %331 = arith.addf %330, %329 : vector<1x128xf32>
    %332 = arith.divf %330, %331 : vector<1x128xf32>
    %333 = arith.select %15, %327, %332 : vector<1x128xi1>, vector<1x128xf32>
    %334 = vector.extract_strided_slice %333 {offsets = [0, 0], sizes = [1, 32], strides = [1, 1]} : vector<1x128xf32> to vector<1x32xf32>
    %335 = vector.extract_strided_slice %333 {offsets = [0, 32], sizes = [1, 32], strides = [1, 1]} : vector<1x128xf32> to vector<1x32xf32>
    %336 = vector.extract_strided_slice %333 {offsets = [0, 64], sizes = [1, 32], strides = [1, 1]} : vector<1x128xf32> to vector<1x32xf32>
    %337 = vector.extract_strided_slice %333 {offsets = [0, 96], sizes = [1, 32], strides = [1, 1]} : vector<1x128xf32> to vector<1x32xf32>
    %338 = arith.mulf %335, %299 : vector<1x32xf32>
    %339 = arith.mulf %334, %336 : vector<1x32xf32>
    %340 = arith.addf %338, %339 : vector<1x32xf32>
    %341 = math.tanh %340 : vector<1x32xf32>
    %342 = arith.mulf %337, %341 : vector<1x32xf32>
    %343 = arith.index_cast %c7_i32 : i32 to index
    %c0_61 = arith.constant 0 : index
    %344 = vector.load %arg11[%343, %c0_61] : memref<8x32xf32, #tpu.memory_space<vmem>>, vector<1x32xf32>
    tpu.vector_store %arg11[%343, %c0_61], %342 {strides = array<i32>} : memref<8x32xf32, #tpu.memory_space<vmem>>, vector<1x32xf32>,
    %c8_i32 = arith.constant 8 : i32
    %c0_62 = arith.constant 0 : index
    %c0_63 = arith.constant 0 : index
    %345 = vector.load %arg11[%c0_62, %c0_63] : memref<8x32xf32, #tpu.memory_space<vmem>>, vector<8x32xf32>
    %c0_64 = arith.constant 0 : index
    %c0_65 = arith.constant 0 : index
    %346 = vector.load %arg6[%c0_64, %c0_65] : memref<32x2xf32, #tpu.memory_space<vmem>>, vector<32x2xf32>
    %cst_66 = arith.constant dense<0.000000e+00> : vector<8x2xf32>
    %347 = tpu.matmul %345, %346, %cst_66 {dimension_numbers = #tpu.dot_dimension_numbers<[1], [0], [0], [1], [0, 0, 1, 1], [], []>} : vector<8x32xf32>, vector<32x2xf32>, vector<8x2xf32> -> vector<8x2xf32>
    %c0_67 = arith.constant 0 : index
    %c0_68 = arith.constant 0 : index
    %348 = vector.load %arg7[%c0_67, %c0_68] : memref<1x2xf32, #tpu.memory_space<vmem>>, vector<1x2xf32>
    %349 = vector.broadcast %348 : vector<1x2xf32> to vector<8x2xf32>
    %350 = arith.addf %347, %349 : vector<8x2xf32>
    %cst_69 = arith.constant dense<0xFF800000> : vector<8xf32>
    %351 = vector.multi_reduction <maximumf>, %350, %cst_69 [1] : vector<8x2xf32> to vector<8xf32>
    %352 = vector.shape_cast %351 : vector<8xf32> to vector<8x1xf32>
    %353 = vector.broadcast %352 : vector<8x1xf32> to vector<8x2xf32>
    %354 = arith.subf %350, %353 : vector<8x2xf32>
    %355 = math.exp %354 : vector<8x2xf32>
    %cst_70 = arith.constant dense<0.000000e+00> : vector<8xf32>
    %356 = vector.multi_reduction <add>, %355, %cst_70 [1] : vector<8x2xf32> to vector<8xf32>
    %357 = vector.shape_cast %356 : vector<8xf32> to vector<8x1xf32>
    %358 = math.log %357 : vector<8x1xf32>
    %359 = arith.addf %352, %358 : vector<8x1xf32>
    %c0_71 = arith.constant 0 : index
    %c0_72 = arith.constant 0 : index
    %360 = vector.load %arg9[%c0_71, %c0_72] : memref<8x2xf32, #tpu.memory_space<vmem>>, vector<8x2xf32>
    tpu.vector_store %arg9[%c0_71, %c0_72], %350 {strides = array<i32>} : memref<8x2xf32, #tpu.memory_space<vmem>>, vector<8x2xf32>,
    %361 = vector.broadcast %359 : vector<8x1xf32> to vector<8x2xf32>
    %362 = arith.subf %350, %361 : vector<8x2xf32>
    %c0_73 = arith.constant 0 : index
    %c0_74 = arith.constant 0 : index
    %363 = vector.load %arg8[%c0_73, %c0_74] : memref<8x2xf32, #tpu.memory_space<vmem>>, vector<8x2xf32>
    tpu.vector_store %arg8[%c0_73, %c0_74], %362 {strides = array<i32>} : memref<8x2xf32, #tpu.memory_space<vmem>>, vector<8x2xf32>,
    return
  }
}

</mosaic_0001>

<llo_original>
// kernel: tpu_custom_call.1
$region0: #{tpu_custom_call.1}
  #allocation0 [shape = 'u32[]', space=smem, size = 0x4, offset = 0x4, fixed_abs, tag = 'smem constant byte address 0x4 - core index']
  #allocation1 [shape = 'u32[144,128]{1,0:T(1,128)}', space=vmem, size = 0x12000, scoped, tag = 'internal scratch']
  #allocation2 [shape = 'f32[8,128]{1,0:T(8,128)}', space=vmem, size = 0x1000, scoped, tag = 'scratch operand']
  #allocation3 [shape = 'f32[8,32]{1,0:T(8,128)}', space=vmem, size = 0x1000, scoped, tag = 'scratch operand']
  %s0 = inlined_call_operand.hbm [shape: f32[8,16], index: 0, kind: input, shape index: {}]
  %s1 = inlined_call_operand.hbm [shape: f32[16,128], index: 1, kind: input, shape index: {}]
  %s2 = inlined_call_operand.vmem [shape: f32[1,128], index: 2, kind: input, shape index: {}]
  %s3 = inlined_call_operand.vmem [shape: f32[32,128], index: 3, kind: input, shape index: {}]
  %s4 = inlined_call_operand.hbm [shape: f32[64,128], index: 4, kind: input, shape index: {}]
  %s5 = inlined_call_operand.vmem [shape: f32[1,128], index: 5, kind: input, shape index: {}]
  %s6 = inlined_call_operand.vmem [shape: f32[32,2], index: 6, kind: input, shape index: {}]
  %s7 = inlined_call_operand.vmem [shape: f32[1,2], index: 7, kind: input, shape index: {}]
  %s8 = inlined_call_operand.vmem [shape: f32[8,2], index: 8, kind: output, shape index: {0}]
  %s9 = inlined_call_operand.vmem [shape: f32[8,2], index: 9, kind: output, shape index: {1}]
  %10 = xla_tuple %s8, %s9
  %s11 = sld [smem:[#allocation0]]
  $region62: #{tpu_custom_call.1} parent=0
    _
  %s13 = ssub.s32 1, %s11
  %s14 = scalar_select 0, %s13, %s11
  $region1: #{tpu_custom_call.1} parent=0
    #allocation4 [shape = 'u8[4096]{0}', space=vmem, size = 0x1000, scoped, tag = 'input window, operand 0, single buffered']
    #allocation5 [shape = 's32[1]{0}', space=sflag, size = 0x4, scoped, tag = 'scoped memory for tpu_custom_call.1']
    #allocation6 [shape = 'u8[8192]{0}', space=vmem, size = 0x2000, scoped, tag = 'input window, operand 1, single buffered']
    #allocation7 [shape = 's32[1]{0}', space=sflag, size = 0x4, scoped, tag = 'scoped memory for tpu_custom_call.1']
    #allocation8 [shape = 'u8[32768]{0}', space=vmem, size = 0x8000, scoped, tag = 'input window, operand 4, single buffered']
    %15 = vsyncpa [#allocation5], 0
    %16 = vsyncpa [#allocation7], 0
    // Predicated region
    $region2: #{tpu_custom_call.1} parent=1 // pred_check
      _
    $region3: #{tpu_custom_call.1} parent=1 // pred_check_branch
      %18 = sbr.rel (0) target = $region5
    $region4: #{tpu_custom_call.1} parent=1 // pred_region
      %s20 = ssub.s32 128, 128
      %21 = vsyncadd [#allocation5], %s20
      %s23 = sshll.u32 [#allocation4], 4
      %s24 = int_to_ptr.vmem [resolvable:$true] %s23
      %26 = dma.hbm_to_vmem [thread:$0]  %s0, 128, %s24, [#allocation5]
    $region5: #{tpu_custom_call.1} parent=1 // pred_fallthru
      _
    // Predicated region
    $region6: #{tpu_custom_call.1} parent=1 // pred_check
      _
    $region7: #{tpu_custom_call.1} parent=1 // pred_check_branch
      %28 = sbr.rel (0) target = $region9
    $region8: #{tpu_custom_call.1} parent=1 // pred_region
      %s30 = ssub.s32 256, 256
      %31 = vsyncadd [#allocation7], %s30
      %s32 = sshll.u32 [#allocation6], 4
      %s33 = int_to_ptr.vmem [resolvable:$true] %s32
      %38 = dma.hbm_to_vmem [thread:$0]  %s1, 256, %s33, [#allocation7], 128, 128, 8
    $region9: #{tpu_custom_call.1} parent=1 // pred_fallthru
      _
    // Predicated region
    $region10: #{tpu_custom_call.1} parent=1 // pred_check
      _
    $region11: #{tpu_custom_call.1} parent=1 // pred_check_branch
      %40 = sbr.rel (0) target = $region13
    $region12: #{tpu_custom_call.1} parent=1 // pred_region
      _
    $region13: #{tpu_custom_call.1} parent=1 // pred_fallthru
      _
    // Predicated region
    $region14: #{tpu_custom_call.1} parent=1 // pred_check
      _
    $region15: #{tpu_custom_call.1} parent=1 // pred_check_branch
      %42 = sbr.rel (0) target = $region17
    $region16: #{tpu_custom_call.1} parent=1 // pred_region
      _
    $region17: #{tpu_custom_call.1} parent=1 // pred_fallthru
      _
    // Predicated region
    $region18: #{tpu_custom_call.1} parent=1 // pred_check
      _
    $region19: #{tpu_custom_call.1} parent=1 // pred_check_branch
      %44 = sbr.rel (0) target = $region21
    $region20: #{tpu_custom_call.1} parent=1 // pred_region
      %s46 = ssub.s32 1024, 1024
      %47 = vsyncadd [#allocation7], %s46
      %s48 = sshll.u32 [#allocation8], 4
      %s49 = int_to_ptr.vmem [resolvable:$true] %s48
      %54 = dma.hbm_to_vmem [thread:$0]  %s4, 1024, %s49, [#allocation7], 128, 128, 8
    $region21: #{tpu_custom_call.1} parent=1 // pred_fallthru
      _
    // Predicated region
    $region22: #{tpu_custom_call.1} parent=1 // pred_check
      _
    $region23: #{tpu_custom_call.1} parent=1 // pred_check_branch
      %56 = sbr.rel (0) target = $region25
    $region24: #{tpu_custom_call.1} parent=1 // pred_region
      _
    $region25: #{tpu_custom_call.1} parent=1 // pred_fallthru
      _
    // Predicated region
    $region26: #{tpu_custom_call.1} parent=1 // pred_check
      _
    $region27: #{tpu_custom_call.1} parent=1 // pred_check_branch
      %58 = sbr.rel (0) target = $region29
    $region28: #{tpu_custom_call.1} parent=1 // pred_region
      _
    $region29: #{tpu_custom_call.1} parent=1 // pred_fallthru
      _
    // Predicated region
    $region30: #{tpu_custom_call.1} parent=1 // pred_check
      _
    $region31: #{tpu_custom_call.1} parent=1 // pred_check_branch
      %60 = sbr.rel (0) target = $region33
    $region32: #{tpu_custom_call.1} parent=1 // pred_region
      _
    $region33: #{tpu_custom_call.1} parent=1 // pred_fallthru
      _
    // Predicated region
    $region34: #{tpu_custom_call.1} parent=1 // pred_check
      _
    $region35: #{tpu_custom_call.1} parent=1 // pred_check_branch
      %62 = sbr.rel (0) target = $region37
    $region36: #{tpu_custom_call.1} parent=1 // pred_region
      %63 = dma.done [#allocation5], 128
    $region37: #{tpu_custom_call.1} parent=1 // pred_fallthru
      _
    // Predicated region
    $region38: #{tpu_custom_call.1} parent=1 // pred_check
      _
    $region39: #{tpu_custom_call.1} parent=1 // pred_check_branch
      %65 = sbr.rel (0) target = $region41
    $region40: #{tpu_custom_call.1} parent=1 // pred_region
      %66 = dma.done [#allocation7], 256
    $region41: #{tpu_custom_call.1} parent=1 // pred_fallthru
      _
    // Predicated region
    $region42: #{tpu_custom_call.1} parent=1 // pred_check
      _
    $region43: #{tpu_custom_call.1} parent=1 // pred_check_branch
      %68 = sbr.rel (0) target = $region45
    $region44: #{tpu_custom_call.1} parent=1 // pred_region
      %69 = dma.done [#allocation7], 1024
    $region45: #{tpu_custom_call.1} parent=1 // pred_fallthru
      _
    %v70 = vld [vmem:[#allocation4] sm:$0xff]
    %v71 = vld [vmem:[#allocation6] sm:$0xff]
    %v72 = vld [vmem:[#allocation6 + $0x8] sm:$0xff]
    %v73 = vld [vmem:[%s2] sm:$0x1]
    %v75 = vlaneseq
    %v76 = vshrl.u32 %v75, 7
    %v77 = vsub.s32 0, %v76
    %v78 = vrot.slane %v73, %v77
    %vm80 = vcmask 130048
    %v82 = vsel %vm80, %v70, 0
    %84 = vmatprep.subr.mxu0 0.0
    %85 = vmatpush1.msra.mxu0 0.0
    %86 = vmatprep.subr.mxu0 0.0
    %87 = vmatpush1.msra.mxu0 0.0
    %88 = vmatprep.subr.mxu0 0.0
    %89 = vmatpush1.msra.mxu0 0.0
    %90 = vmatprep.subr.mxu0 0.0
    %91 = vmatpush1.msra.mxu0 0.0
    %92 = vmatprep.subr.mxu0 0.0
    %93 = vmatpush1.msra.mxu0 0.0
    %94 = vmatprep.subr.mxu0 0.0
    %95 = vmatpush1.msra.mxu0 0.0
    %96 = vmatprep.subr.mxu0 0.0
    %97 = vmatpush1.msra.mxu0 0.0
    %98 = vmatprep.subr.mxu0 0.0
    %99 = vmatpush1.msra.mxu0 0.0
    %100 = vmatprep.subr.mxu0 0.0
    %101 = vmatpush1.msra.mxu0 0.0
    %102 = vmatprep.subr.mxu0 0.0
    %103 = vmatpush1.msra.mxu0 0.0
    %104 = vmatprep.subr.mxu0 0.0
    %105 = vmatpush1.msra.mxu0 0.0
    %106 = vmatprep.subr.mxu0 0.0
    %107 = vmatpush1.msra.mxu0 0.0
    %108 = vmatprep.subr.mxu0 0.0
    %109 = vmatpush1.msra.mxu0 0.0
    %110 = vmatprep.subr.mxu0 0.0
    %111 = vmatpush1.msra.mxu0 0.0
    %112 = vmatprep.subr.mxu0 0.0
    %113 = vmatpush1.msra.mxu0 %v72
    %114 = vmatprep.subr.mxu0 0.0
    %115 = vmatpush1.msra.mxu0 %v71
    %116 = vmatprep.subr.mxu0 0.0
    %117 = vmatpush2.msra.mxu0 0.0
    %118 = vmatprep.subr.mxu0 0.0
    %119 = vmatpush2.msra.mxu0 0.0
    %120 = vmatprep.subr.mxu0 0.0
    %121 = vmatpush2.msra.mxu0 0.0
    %122 = vmatprep.subr.mxu0 0.0
    %123 = vmatpush2.msra.mxu0 0.0
    %124 = vmatprep.subr.mxu0 0.0
    %125 = vmatpush2.msra.mxu0 0.0
    %126 = vmatprep.subr.mxu0 0.0
    %127 = vmatpush2.msra.mxu0 0.0
    %128 = vmatprep.subr.mxu0 0.0
    %129 = vmatpush2.msra.mxu0 0.0
    %130 = vmatprep.subr.mxu0 0.0
    %131 = vmatpush2.msra.mxu0 0.0
    %132 = vmatprep.subr.mxu0 0.0
    %133 = vmatpush2.msra.mxu0 0.0
    %134 = vmatprep.subr.mxu0 0.0
    %135 = vmatpush2.msra.mxu0 0.0
    %136 = vmatprep.subr.mxu0 0.0
    %137 = vmatpush2.msra.mxu0 0.0
    %138 = vmatprep.subr.mxu0 0.0
    %139 = vmatpush2.msra.mxu0 0.0
    %140 = vmatprep.subr.mxu0 0.0
    %141 = vmatpush2.msra.mxu0 0.0
    %142 = vmatprep.subr.mxu0 0.0
    %143 = vmatpush2.msra.mxu0 0.0
    %144 = vmatprep.subr.mxu0 0.0
    %145 = vmatpush2.msra.mxu0 0.0
    %146 = vmatprep.subr.mxu0 0.0
    %147 = vmatpush2.msra.mxu0 0.0
    %148 = vmatprep.mubr.f32.mxu0 0.0
    %149 = vmatmul.mubr.f32.gmra.mxu0 %v82
    %v150 = vpop.f32.mrf.mxu0
    %v151 = vadd.f32 %v78, %v150
    %v152 = vpop.f32.mrf.mxu0
    %153 = vdwg.mxu0
    %154 = vst [vmem:[#allocation2] sm:$0xff] %v151
    %v155 = vld [vmem:[%s3] sm:$0xff]
    %v156 = vld [vmem:[%s3 + $0x8] sm:$0xff]
    %v157 = vld [vmem:[%s3 + $0x10] sm:$0xff]
    %v158 = vld [vmem:[%s3 + $0x18] sm:$0xff]
    %v159 = vld [vmem:[#allocation8] sm:$0xff]
    %v160 = vld [vmem:[#allocation8 + $0x8] sm:$0xff]
    %v161 = vld [vmem:[#allocation8 + $0x10] sm:$0xff]
    %v162 = vld [vmem:[#allocation8 + $0x18] sm:$0xff]
    %v163 = vld [vmem:[#allocation8 + $0x20] sm:$0xff]
    %v164 = vld [vmem:[#allocation8 + $0x28] sm:$0xff]
    %v165 = vld [vmem:[#allocation8 + $0x30] sm:$0xff]
    %v166 = vld [vmem:[#allocation8 + $0x38] sm:$0xff]
    %v167 = vld [vmem:[%s5] sm:$0x1]
    %v168 = vlaneseq
    %v169 = vand.u32 %v168, 127
    %vm170 = vcmp.ge.s32.totalorder %v169, 64
    %vm171 = vcmp.lt.s32.totalorder %v169, 96
    %vm172 = vmand %vm170, %vm171
    %v173 = vld [vmem:[#allocation2] sm:$0x1]
    %vm174 = vcmask 261120
    %v176 = vsel %vm174, 0.0, 0
    %178 = vmatprep.subr.mxu0 0.0
    %179 = vmatpush1.msra.mxu0 0.0
    %180 = vmatprep.subr.mxu0 0.0
    %181 = vmatpush1.msra.mxu0 0.0
    %182 = vmatprep.subr.mxu0 0.0
    %183 = vmatpush1.msra.mxu0 0.0
    %184 = vmatprep.subr.mxu0 0.0
    %185 = vmatpush1.msra.mxu0 0.0
    %186 = vmatprep.subr.mxu0 0.0
    %187 = vmatpush1.msra.mxu0 0.0
    %188 = vmatprep.subr.mxu0 0.0
    %189 = vmatpush1.msra.mxu0 0.0
    %190 = vmatprep.subr.mxu0 0.0
    %191 = vmatpush1.msra.mxu0 0.0
    %192 = vmatprep.subr.mxu0 0.0
    %193 = vmatpush1.msra.mxu0 0.0
    %194 = vmatprep.subr.mxu0 0.0
    %195 = vmatpush1.msra.mxu0 0.0
    %196 = vmatprep.subr.mxu0 0.0
    %197 = vmatpush1.msra.mxu0 0.0
    %198 = vmatprep.subr.mxu0 0.0
    %199 = vmatpush1.msra.mxu0 0.0
    %200 = vmatprep.subr.mxu0 0.0
    %201 = vmatpush1.msra.mxu0 0.0
    %202 = vmatprep.subr.mxu0 0.0
    %203 = vmatpush1.msra.mxu0 %v158
    %204 = vmatprep.subr.mxu0 0.0
    %205 = vmatpush1.msra.mxu0 %v157
    %206 = vmatprep.subr.mxu0 0.0
    %207 = vmatpush1.msra.mxu0 %v156
    %208 = vmatprep.subr.mxu0 0.0
    %209 = vmatpush1.msra.mxu0 %v155
    %210 = vmatprep.subr.mxu0 0.0
    %211 = vmatpush2.msra.mxu0 0.0
    %212 = vmatprep.subr.mxu0 0.0
    %213 = vmatpush2.msra.mxu0 0.0
    %214 = vmatprep.subr.mxu0 0.0
    %215 = vmatpush2.msra.mxu0 0.0
    %216 = vmatprep.subr.mxu0 0.0
    %217 = vmatpush2.msra.mxu0 0.0
    %218 = vmatprep.subr.mxu0 0.0
    %219 = vmatpush2.msra.mxu0 0.0
    %220 = vmatprep.subr.mxu0 0.0
    %221 = vmatpush2.msra.mxu0 0.0
    %222 = vmatprep.subr.mxu0 0.0
    %223 = vmatpush2.msra.mxu0 0.0
    %224 = vmatprep.subr.mxu0 0.0
    %225 = vmatpush2.msra.mxu0 0.0
    %226 = vmatprep.subr.mxu0 0.0
    %227 = vmatpush2.msra.mxu0 0.0
    %228 = vmatprep.subr.mxu0 0.0
    %229 = vmatpush2.msra.mxu0 0.0
    %230 = vmatprep.subr.mxu0 0.0
    %231 = vmatpush2.msra.mxu0 0.0
    %232 = vmatprep.subr.mxu0 0.0
    %233 = vmatpush2.msra.mxu0 0.0
    %234 = vmatprep.subr.mxu0 0.0
    %235 = vmatpush2.msra.mxu0 0.0
    %236 = vmatprep.subr.mxu0 0.0
    %237 = vmatpush2.msra.mxu0 0.0
    %238 = vmatprep.subr.mxu0 0.0
    %239 = vmatpush2.msra.mxu0 0.0
    %240 = vmatprep.subr.mxu0 0.0
    %241 = vmatpush2.msra.mxu0 0.0
    %242 = vmatprep.mubr.f32.mxu0 0.0
    %243 = vmatmul.mubr.f32.gmra.mxu0 %v176
    %v244 = vpop.f32.mrf.mxu0
    %v245 = vadd.f32 0.0, %v244
    %v246 = vpop.f32.mrf.mxu0
    %247 = vdwg.mxu0
    %v248 = vadd.f32 %v173, %v245
    %v249 = vtanh.pop %v248
    %v250 = vxor.u32 %v248, 2147483648
    %v251 = vmul.f32 %v250, 1.442695
    %v252 = vpow.pop %v251
    %v253 = vadd.f32 %v252, 1.0
    %v254 = vrcp.pop %v253
    %v255 = vmul.f32 1.0, %v254
    %v256 = vsel %vm172, %v249, %v255
    %v257 = vmul.f32 %v256, 0.0
    %259 = vrot.lane.b32.xlu0 %v256, 64
    %v260 = vpop.permute.xlu0 %259
    %v262 = vmul.f32 %v256, %v260
    %264 = vrot.lane.b32.xlu0 %v262, 32
    %v265 = vpop.permute.xlu0 %264
    %v267 = vadd.f32 %v257, %v265
    %v268 = vtanh.pop %v267
    %270 = vrot.lane.b32.xlu0 %v268, 64
    %v271 = vpop.permute.xlu0 %270
    %v273 = vmul.f32 %v256, %v271
    %275 = vrot.lane.b32.xlu0 %v273, 32
    %v276 = vpop.permute.xlu0 %275
    %v278 = vsel %vm174, %v276, 0.0
    %vm279 = vcmask 523264
    %v281 = vsel %vm279, %v278, 0
    %283 = vmatprep.subr.mxu0 0.0
    %284 = vmatpush1.msra.mxu0 0.0
    %285 = vmatprep.subr.mxu0 0.0
    %286 = vmatpush1.msra.mxu0 0.0
    %287 = vmatprep.subr.mxu0 0.0
    %288 = vmatpush1.msra.mxu0 0.0
    %289 = vmatprep.subr.mxu0 0.0
    %290 = vmatpush1.msra.mxu0 0.0
    %291 = vmatprep.subr.mxu0 0.0
    %292 = vmatpush1.msra.mxu0 0.0
    %293 = vmatprep.subr.mxu0 0.0
    %294 = vmatpush1.msra.mxu0 0.0
    %295 = vmatprep.subr.mxu0 0.0
    %296 = vmatpush1.msra.mxu0 0.0
    %297 = vmatprep.subr.mxu0 0.0
    %298 = vmatpush1.msra.mxu0 0.0
    %299 = vmatprep.subr.mxu0 0.0
    %300 = vmatpush1.msra.mxu0 %v166
    %301 = vmatprep.subr.mxu0 0.0
    %302 = vmatpush1.msra.mxu0 %v165
    %303 = vmatprep.subr.mxu0 0.0
    %304 = vmatpush1.msra.mxu0 %v164
    %305 = vmatprep.subr.mxu0 0.0
    %306 = vmatpush1.msra.mxu0 %v163
    %307 = vmatprep.subr.mxu0 0.0
    %308 = vmatpush1.msra.mxu0 %v162
    %309 = vmatprep.subr.mxu0 0.0
    %310 = vmatpush1.msra.mxu0 %v161
    %311 = vmatprep.subr.mxu0 0.0
    %312 = vmatpush1.msra.mxu0 %v160
    %313 = vmatprep.subr.mxu0 0.0
    %314 = vmatpush1.msra.mxu0 %v159
    %315 = vmatprep.subr.mxu0 0.0
    %316 = vmatpush2.msra.mxu0 0.0
    %317 = vmatprep.subr.mxu0 0.0
    %318 = vmatpush2.msra.mxu0 0.0
    %319 = vmatprep.subr.mxu0 0.0
    %320 = vmatpush2.msra.mxu0 0.0
    %321 = vmatprep.subr.mxu0 0.0
    %322 = vmatpush2.msra.mxu0 0.0
    %323 = vmatprep.subr.mxu0 0.0
    %324 = vmatpush2.msra.mxu0 0.0
    %325 = vmatprep.subr.mxu0 0.0
    %326 = vmatpush2.msra.mxu0 0.0
    %327 = vmatprep.subr.mxu0 0.0
    %328 = vmatpush2.msra.mxu0 0.0
    %329 = vmatprep.subr.mxu0 0.0
    %330 = vmatpush2.msra.mxu0 0.0
    %331 = vmatprep.subr.mxu0 0.0
    %332 = vmatpush2.msra.mxu0 0.0
    %333 = vmatprep.subr.mxu0 0.0
    %334 = vmatpush2.msra.mxu0 0.0
    %335 = vmatprep.subr.mxu0 0.0
    %336 = vmatpush2.msra.mxu0 0.0
    %337 = vmatprep.subr.mxu0 0.0
    %338 = vmatpush2.msra.mxu0 0.0
    %339 = vmatprep.subr.mxu0 0.0
    %340 = vmatpush2.msra.mxu0 0.0
    %341 = vmatprep.subr.mxu0 0.0
    %342 = vmatpush2.msra.mxu0 0.0
    %343 = vmatprep.subr.mxu0 0.0
    %344 = vmatpush2.msra.mxu0 0.0
    %345 = vmatprep.subr.mxu0 0.0
    %346 = vmatpush2.msra.mxu0 0.0
    %347 = vmatprep.mubr.f32.mxu0 0.0
    %348 = vmatmul.mubr.f32.gmra.mxu0 %v281
    %v349 = vpop.f32.mrf.mxu0
    %v350 = vadd.f32 %v167, %v349
    %v351 = vpop.f32.mrf.mxu0
    %352 = vdwg.mxu0
    %v353 = vtanh.pop %v350
    %v354 = vxor.u32 %v350, 2147483648
    %v355 = vmul.f32 %v354, 1.442695
    %v356 = vpow.pop %v355
    %v357 = vadd.f32 %v356, 1.0
    %v358 = vrcp.pop %v357
    %v359 = vmul.f32 1.0, %v358
    %v360 = vsel %vm172, %v353, %v359
    %v361 = vmul.f32 %v360, 0.0
    %363 = vrot.lane.b32.xlu0 %v360, 64
    %v364 = vpop.permute.xlu0 %363
    %v366 = vmul.f32 %v360, %v364
    %368 = vrot.lane.b32.xlu0 %v366, 32
    %v369 = vpop.permute.xlu0 %368
    %v371 = vadd.f32 %v361, %v369
    %v372 = vtanh.pop %v371
    %374 = vrot.lane.b32.xlu0 %v372, 64
    %v375 = vpop.permute.xlu0 %374
    %v377 = vmul.f32 %v360, %v375
    %379 = vrot.lane.b32.xlu0 %v377, 32
    %v380 = vpop.permute.xlu0 %379
    %vm382 = vcmask 253952
    %383 = vst.msk [vmem:[#allocation3] sm:$0x1] %vm382, %v380
    %v384 = vld [vmem:[#allocation2 + $0x1] sm:$0x1]
    %v385 = vsel %vm174, %v276, 0
    %387 = vmatprep.subr.mxu0 0.0
    %388 = vmatpush1.msra.mxu0 0.0
    %389 = vmatprep.subr.mxu0 0.0
    %390 = vmatpush1.msra.mxu0 0.0
    %391 = vmatprep.subr.mxu0 0.0
    %392 = vmatpush1.msra.mxu0 0.0
    %393 = vmatprep.subr.mxu0 0.0
    %394 = vmatpush1.msra.mxu0 0.0
    %395 = vmatprep.subr.mxu0 0.0
    %396 = vmatpush1.msra.mxu0 0.0
    %397 = vmatprep.subr.mxu0 0.0
    %398 = vmatpush1.msra.mxu0 0.0
    %399 = vmatprep.subr.mxu0 0.0
    %400 = vmatpush1.msra.mxu0 0.0
    %401 = vmatprep.subr.mxu0 0.0
    %402 = vmatpush1.msra.mxu0 0.0
    %403 = vmatprep.subr.mxu0 0.0
    %404 = vmatpush1.msra.mxu0 0.0
    %405 = vmatprep.subr.mxu0 0.0
    %406 = vmatpush1.msra.mxu0 0.0
    %407 = vmatprep.subr.mxu0 0.0
    %408 = vmatpush1.msra.mxu0 0.0
    %409 = vmatprep.subr.mxu0 0.0
    %410 = vmatpush1.msra.mxu0 0.0
    %411 = vmatprep.subr.mxu0 0.0
    %412 = vmatpush1.msra.mxu0 %v158
    %413 = vmatprep.subr.mxu0 0.0
    %414 = vmatpush1.msra.mxu0 %v157
    %415 = vmatprep.subr.mxu0 0.0
    %416 = vmatpush1.msra.mxu0 %v156
    %417 = vmatprep.subr.mxu0 0.0
    %418 = vmatpush1.msra.mxu0 %v155
    %419 = vmatprep.subr.mxu0 0.0
    %420 = vmatpush2.msra.mxu0 0.0
    %421 = vmatprep.subr.mxu0 0.0
    %422 = vmatpush2.msra.mxu0 0.0
    %423 = vmatprep.subr.mxu0 0.0
    %424 = vmatpush2.msra.mxu0 0.0
    %425 = vmatprep.subr.mxu0 0.0
    %426 = vmatpush2.msra.mxu0 0.0
    %427 = vmatprep.subr.mxu0 0.0
    %428 = vmatpush2.msra.mxu0 0.0
    %429 = vmatprep.subr.mxu0 0.0
    %430 = vmatpush2.msra.mxu0 0.0
    %431 = vmatprep.subr.mxu0 0.0
    %432 = vmatpush2.msra.mxu0 0.0
    %433 = vmatprep.subr.mxu0 0.0
    %434 = vmatpush2.msra.mxu0 0.0
    %435 = vmatprep.subr.mxu0 0.0
    %436 = vmatpush2.msra.mxu0 0.0
    %437 = vmatprep.subr.mxu0 0.0
    %438 = vmatpush2.msra.mxu0 0.0
    %439 = vmatprep.subr.mxu0 0.0
    %440 = vmatpush2.msra.mxu0 0.0
    %441 = vmatprep.subr.mxu0 0.0
    %442 = vmatpush2.msra.mxu0 0.0
    %443 = vmatprep.subr.mxu0 0.0
    %444 = vmatpush2.msra.mxu0 0.0
    %445 = vmatprep.subr.mxu0 0.0
    %446 = vmatpush2.msra.mxu0 0.0
    %447 = vmatprep.subr.mxu0 0.0
    %448 = vmatpush2.msra.mxu0 0.0
    %449 = vmatprep.subr.mxu0 0.0
    %450 = vmatpush2.msra.mxu0 0.0
    %451 = vmatprep.mubr.f32.mxu0 0.0
    %452 = vmatmul.mubr.f32.gmra.mxu0 %v385
    %v453 = vpop.f32.mrf.mxu0
    %v454 = vadd.f32 0.0, %v453
    %v455 = vpop.f32.mrf.mxu0
    %456 = vdwg.mxu0
    %v457 = vadd.f32 %v384, %v454
    %v458 = vtanh.pop %v457
    %v459 = vxor.u32 %v457, 2147483648
    %v460 = vmul.f32 %v459, 1.442695
    %v461 = vpow.pop %v460
    %v462 = vadd.f32 %v461, 1.0
    %v463 = vrcp.pop %v462
    %v464 = vmul.f32 1.0, %v463
    %v465 = vsel %vm172, %v458, %v464
    %v466 = vmul.f32 %v465, %v267
    %468 = vrot.lane.b32.xlu0 %v465, 64
    %v469 = vpop.permute.xlu0 %468
    %v471 = vmul.f32 %v465, %v469
    %473 = vrot.lane.b32.xlu0 %v471, 32
    %v474 = vpop.permute.xlu0 %473
    %v476 = vadd.f32 %v466, %v474
    %v477 = vtanh.pop %v476
    %479 = vrot.lane.b32.xlu0 %v477, 64
    %v480 = vpop.permute.xlu0 %479
    %v482 = vmul.f32 %v465, %v480
    %484 = vrot.lane.b32.xlu0 %v482, 32
    %v485 = vpop.permute.xlu0 %484
    %487 = vrot.lane.b32.xlu0 %v377, 64
    %v488 = vpop.permute.xlu0 %487
    %v490 = vsel %vm174, %v485, %v488
    %v492 = vsel %vm279, %v490, 0
    %494 = vmatprep.subr.mxu0 0.0
    %495 = vmatpush1.msra.mxu0 0.0
    %496 = vmatprep.subr.mxu0 0.0
    %497 = vmatpush1.msra.mxu0 0.0
    %498 = vmatprep.subr.mxu0 0.0
    %499 = vmatpush1.msra.mxu0 0.0
    %500 = vmatprep.subr.mxu0 0.0
    %501 = vmatpush1.msra.mxu0 0.0
    %502 = vmatprep.subr.mxu0 0.0
    %503 = vmatpush1.msra.mxu0 0.0
    %504 = vmatprep.subr.mxu0 0.0
    %505 = vmatpush1.msra.mxu0 0.0
    %506 = vmatprep.subr.mxu0 0.0
    %507 = vmatpush1.msra.mxu0 0.0
    %508 = vmatprep.subr.mxu0 0.0
    %509 = vmatpush1.msra.mxu0 0.0
    %510 = vmatprep.subr.mxu0 0.0
    %511 = vmatpush1.msra.mxu0 %v166
    %512 = vmatprep.subr.mxu0 0.0
    %513 = vmatpush1.msra.mxu0 %v165
    %514 = vmatprep.subr.mxu0 0.0
    %515 = vmatpush1.msra.mxu0 %v164
    %516 = vmatprep.subr.mxu0 0.0
    %517 = vmatpush1.msra.mxu0 %v163
    %518 = vmatprep.subr.mxu0 0.0
    %519 = vmatpush1.msra.mxu0 %v162
    %520 = vmatprep.subr.mxu0 0.0
    %521 = vmatpush1.msra.mxu0 %v161
    %522 = vmatprep.subr.mxu0 0.0
    %523 = vmatpush1.msra.mxu0 %v160
    %524 = vmatprep.subr.mxu0 0.0
    %525 = vmatpush1.msra.mxu0 %v159
    %526 = vmatprep.subr.mxu0 0.0
    %527 = vmatpush2.msra.mxu0 0.0
    %528 = vmatprep.subr.mxu0 0.0
    %529 = vmatpush2.msra.mxu0 0.0
    %530 = vmatprep.subr.mxu0 0.0
    %531 = vmatpush2.msra.mxu0 0.0
    %532 = vmatprep.subr.mxu0 0.0
    %533 = vmatpush2.msra.mxu0 0.0
    %534 = vmatprep.subr.mxu0 0.0
    %535 = vmatpush2.msra.mxu0 0.0
    %536 = vmatprep.subr.mxu0 0.0
    %537 = vmatpush2.msra.mxu0 0.0
    %538 = vmatprep.subr.mxu0 0.0
    %539 = vmatpush2.msra.mxu0 0.0
    %540 = vmatprep.subr.mxu0 0.0
    %541 = vmatpush2.msra.mxu0 0.0
    %542 = vmatprep.subr.mxu0 0.0
    %543 = vmatpush2.msra.mxu0 0.0
    %544 = vmatprep.subr.mxu0 0.0
    %545 = vmatpush2.msra.mxu0 0.0
    %546 = vmatprep.subr.mxu0 0.0
    %547 = vmatpush2.msra.mxu0 0.0
    %548 = vmatprep.subr.mxu0 0.0
    %549 = vmatpush2.msra.mxu0 0.0
    %550 = vmatprep.subr.mxu0 0.0
    %551 = vmatpush2.msra.mxu0 0.0
    %552 = vmatprep.subr.mxu0 0.0
    %553 = vmatpush2.msra.mxu0 0.0
    %554 = vmatprep.subr.mxu0 0.0
    %555 = vmatpush2.msra.mxu0 0.0
    %556 = vmatprep.subr.mxu0 0.0
    %557 = vmatpush2.msra.mxu0 0.0
    %558 = vmatprep.mubr.f32.mxu0 0.0
    %559 = vmatmul.mubr.f32.gmra.mxu0 %v492
    %v560 = vpop.f32.mrf.mxu0
    %v561 = vadd.f32 %v167, %v560
    %v562 = vpop.f32.mrf.mxu0
    %563 = vdwg.mxu0
    %v564 = vtanh.pop %v561
    %v565 = vxor.u32 %v561, 2147483648
    %v566 = vmul.f32 %v565, 1.442695
    %v567 = vpow.pop %v566
    %v568 = vadd.f32 %v567, 1.0
    %v569 = vrcp.pop %v568
    %v570 = vmul.f32 1.0, %v569
    %v571 = vsel %vm172, %v564, %v570
    %v572 = vmul.f32 %v571, %v371
    %574 = vrot.lane.b32.xlu0 %v571, 64
    %v575 = vpop.permute.xlu0 %574
    %v577 = vmul.f32 %v571, %v575
    %579 = vrot.lane.b32.xlu0 %v577, 32
    %v580 = vpop.permute.xlu0 %579
    %v582 = vadd.f32 %v572, %v580
    %v583 = vtanh.pop %v582
    %585 = vrot.lane.b32.xlu0 %v583, 64
    %v586 = vpop.permute.xlu0 %585
    %v588 = vmul.f32 %v571, %v586
    %590 = vrot.lane.b32.xlu0 %v588, 32
    %v591 = vpop.permute.xlu0 %590
    %593 = vst.msk [vmem:[#allocation3 + $0x1] sm:$0x1] %vm382, %v591
    %v594 = vld [vmem:[#allocation2 + $0x2] sm:$0x1]
    %v595 = vsel %vm174, %v485, 0
    %597 = vmatprep.subr.mxu0 0.0
    %598 = vmatpush1.msra.mxu0 0.0
    %599 = vmatprep.subr.mxu0 0.0
    %600 = vmatpush1.msra.mxu0 0.0
    %601 = vmatprep.subr.mxu0 0.0
    %602 = vmatpush1.msra.mxu0 0.0
    %603 = vmatprep.subr.mxu0 0.0
    %604 = vmatpush1.msra.mxu0 0.0
    %605 = vmatprep.subr.mxu0 0.0
    %606 = vmatpush1.msra.mxu0 0.0
    %607 = vmatprep.subr.mxu0 0.0
    %608 = vmatpush1.msra.mxu0 0.0
    %609 = vmatprep.subr.mxu0 0.0
    %610 = vmatpush1.msra.mxu0 0.0
    %611 = vmatprep.subr.mxu0 0.0
    %612 = vmatpush1.msra.mxu0 0.0
    %613 = vmatprep.subr.mxu0 0.0
    %614 = vmatpush1.msra.mxu0 0.0
    %615 = vmatprep.subr.mxu0 0.0
    %616 = vmatpush1.msra.mxu0 0.0
    %617 = vmatprep.subr.mxu0 0.0
    %618 = vmatpush1.msra.mxu0 0.0
    %619 = vmatprep.subr.mxu0 0.0
    %620 = vmatpush1.msra.mxu0 0.0
    %621 = vmatprep.subr.mxu0 0.0
    %622 = vmatpush1.msra.mxu0 %v158
    %623 = vmatprep.subr.mxu0 0.0
    %624 = vmatpush1.msra.mxu0 %v157
    %625 = vmatprep.subr.mxu0 0.0
    %626 = vmatpush1.msra.mxu0 %v156
    %627 = vmatprep.subr.mxu0 0.0
    %628 = vmatpush1.msra.mxu0 %v155
    %629 = vmatprep.subr.mxu0 0.0
    %630 = vmatpush2.msra.mxu0 0.0
    %631 = vmatprep.subr.mxu0 0.0
    %632 = vmatpush2.msra.mxu0 0.0
    %633 = vmatprep.subr.mxu0 0.0
    %634 = vmatpush2.msra.mxu0 0.0
    %635 = vmatprep.subr.mxu0 0.0
    %636 = vmatpush2.msra.mxu0 0.0
    %637 = vmatprep.subr.mxu0 0.0
    %638 = vmatpush2.msra.mxu0 0.0
    %639 = vmatprep.subr.mxu0 0.0
    %640 = vmatpush2.msra.mxu0 0.0
    %641 = vmatprep.subr.mxu0 0.0
    %642 = vmatpush2.msra.mxu0 0.0
    %643 = vmatprep.subr.mxu0 0.0
    %644 = vmatpush2.msra.mxu0 0.0
    %645 = vmatprep.subr.mxu0 0.0
    %646 = vmatpush2.msra.mxu0 0.0
    %647 = vmatprep.subr.mxu0 0.0
    %648 = vmatpush2.msra.mxu0 0.0
    %649 = vmatprep.subr.mxu0 0.0
    %650 = vmatpush2.msra.mxu0 0.0
    %651 = vmatprep.subr.mxu0 0.0
    %652 = vmatpush2.msra.mxu0 0.0
    %653 = vmatprep.subr.mxu0 0.0
    %654 = vmatpush2.msra.mxu0 0.0
    %655 = vmatprep.subr.mxu0 0.0
    %656 = vmatpush2.msra.mxu0 0.0
    %657 = vmatprep.subr.mxu0 0.0
    %658 = vmatpush2.msra.mxu0 0.0
    %659 = vmatprep.subr.mxu0 0.0
    %660 = vmatpush2.msra.mxu0 0.0
    %661 = vmatprep.mubr.f32.mxu0 0.0
    %662 = vmatmul.mubr.f32.gmra.mxu0 %v595
    %v663 = vpop.f32.mrf.mxu0
    %v664 = vadd.f32 0.0, %v663
    %v665 = vpop.f32.mrf.mxu0
    %666 = vdwg.mxu0
    %v667 = vadd.f32 %v594, %v664
    %v668 = vtanh.pop %v667
    %v669 = vxor.u32 %v667, 2147483648
    %v670 = vmul.f32 %v669, 1.442695
    %v671 = vpow.pop %v670
    %v672 = vadd.f32 %v671, 1.0
    %v673 = vrcp.pop %v672
    %v674 = vmul.f32 1.0, %v673
    %v675 = vsel %vm172, %v668, %v674
    %v676 = vmul.f32 %v675, %v476
    %678 = vrot.lane.b32.xlu0 %v675, 64
    %v679 = vpop.permute.xlu0 %678
    %v681 = vmul.f32 %v675, %v679
    %683 = vrot.lane.b32.xlu0 %v681, 32
    %v684 = vpop.permute.xlu0 %683
    %v686 = vadd.f32 %v676, %v684
    %v687 = vtanh.pop %v686
    %689 = vrot.lane.b32.xlu0 %v687, 64
    %v690 = vpop.permute.xlu0 %689
    %v692 = vmul.f32 %v675, %v690
    %694 = vrot.lane.b32.xlu0 %v692, 32
    %v695 = vpop.permute.xlu0 %694
    %697 = vrot.lane.b32.xlu0 %v588, 64
    %v698 = vpop.permute.xlu0 %697
    %v700 = vsel %vm174, %v695, %v698
    %v702 = vsel %vm279, %v700, 0
    %704 = vmatprep.subr.mxu0 0.0
    %705 = vmatpush1.msra.mxu0 0.0
    %706 = vmatprep.subr.mxu0 0.0
    %707 = vmatpush1.msra.mxu0 0.0
    %708 = vmatprep.subr.mxu0 0.0
    %709 = vmatpush1.msra.mxu0 0.0
    %710 = vmatprep.subr.mxu0 0.0
    %711 = vmatpush1.msra.mxu0 0.0
    %712 = vmatprep.subr.mxu0 0.0
    %713 = vmatpush1.msra.mxu0 0.0
    %714 = vmatprep.subr.mxu0 0.0
    %715 = vmatpush1.msra.mxu0 0.0
    %716 = vmatprep.subr.mxu0 0.0
    %717 = vmatpush1.msra.mxu0 0.0
    %718 = vmatprep.subr.mxu0 0.0
    %719 = vmatpush1.msra.mxu0 0.0
    %720 = vmatprep.subr.mxu0 0.0
    %721 = vmatpush1.msra.mxu0 %v166
    %722 = vmatprep.subr.mxu0 0.0
    %723 = vmatpush1.msra.mxu0 %v165
    %724 = vmatprep.subr.mxu0 0.0
    %725 = vmatpush1.msra.mxu0 %v164
    %726 = vmatprep.subr.mxu0 0.0
    %727 = vmatpush1.msra.mxu0 %v163
    %728 = vmatprep.subr.mxu0 0.0
    %729 = vmatpush1.msra.mxu0 %v162
    %730 = vmatprep.subr.mxu0 0.0
    %731 = vmatpush1.msra.mxu0 %v161
    %732 = vmatprep.subr.mxu0 0.0
    %733 = vmatpush1.msra.mxu0 %v160
    %734 = vmatprep.subr.mxu0 0.0
    %735 = vmatpush1.msra.mxu0 %v159
    %736 = vmatprep.subr.mxu0 0.0
    %737 = vmatpush2.msra.mxu0 0.0
    %738 = vmatprep.subr.mxu0 0.0
    %739 = vmatpush2.msra.mxu0 0.0
    %740 = vmatprep.subr.mxu0 0.0
    %741 = vmatpush2.msra.mxu0 0.0
    %742 = vmatprep.subr.mxu0 0.0
    %743 = vmatpush2.msra.mxu0 0.0
    %744 = vmatprep.subr.mxu0 0.0
    %745 = vmatpush2.msra.mxu0 0.0
    %746 = vmatprep.subr.mxu0 0.0
    %747 = vmatpush2.msra.mxu0 0.0
    %748 = vmatprep.subr.mxu0 0.0
    %749 = vmatpush2.msra.mxu0 0.0
    %750 = vmatprep.subr.mxu0 0.0
    %751 = vmatpush2.msra.mxu0 0.0
    %752 = vmatprep.subr.mxu0 0.0
    %753 = vmatpush2.msra.mxu0 0.0
    %754 = vmatprep.subr.mxu0 0.0
    %755 = vmatpush2.msra.mxu0 0.0
    %756 = vmatprep.subr.mxu0 0.0
    %757 = vmatpush2.msra.mxu0 0.0
    %758 = vmatprep.subr.mxu0 0.0
    %759 = vmatpush2.msra.mxu0 0.0
    %760 = vmatprep.subr.mxu0 0.0
    %761 = vmatpush2.msra.mxu0 0.0
    %762 = vmatprep.subr.mxu0 0.0
    %763 = vmatpush2.msra.mxu0 0.0
    %764 = vmatprep.subr.mxu0 0.0
    %765 = vmatpush2.msra.mxu0 0.0
    %766 = vmatprep.subr.mxu0 0.0
    %767 = vmatpush2.msra.mxu0 0.0
    %768 = vmatprep.mubr.f32.mxu0 0.0
    %769 = vmatmul.mubr.f32.gmra.mxu0 %v702
    %v770 = vpop.f32.mrf.mxu0
    %v771 = vadd.f32 %v167, %v770
    %v772 = vpop.f32.mrf.mxu0
    %773 = vdwg.mxu0
    %v774 = vtanh.pop %v771
    %v775 = vxor.u32 %v771, 2147483648
    %v776 = vmul.f32 %v775, 1.442695
    %v777 = vpow.pop %v776
    %v778 = vadd.f32 %v777, 1.0
    %v779 = vrcp.pop %v778
    %v780 = vmul.f32 1.0, %v779
    %v781 = vsel %vm172, %v774, %v780
    %v782 = vmul.f32 %v781, %v582
    %784 = vrot.lane.b32.xlu0 %v781, 64
    %v785 = vpop.permute.xlu0 %784
    %v787 = vmul.f32 %v781, %v785
    %789 = vrot.lane.b32.xlu0 %v787, 32
    %v790 = vpop.permute.xlu0 %789
    %v792 = vadd.f32 %v782, %v790
    %v793 = vtanh.pop %v792
    %795 = vrot.lane.b32.xlu0 %v793, 64
    %v796 = vpop.permute.xlu0 %795
    %v798 = vmul.f32 %v781, %v796
    %800 = vrot.lane.b32.xlu0 %v798, 32
    %v801 = vpop.permute.xlu0 %800
    %803 = vst.msk [vmem:[#allocation3 + $0x2] sm:$0x1] %vm382, %v801
    %v804 = vld [vmem:[#allocation2 + $0x3] sm:$0x1]
    %v805 = vsel %vm174, %v695, 0
    %807 = vmatprep.subr.mxu0 0.0
    %808 = vmatpush1.msra.mxu0 0.0
    %809 = vmatprep.subr.mxu0 0.0
    %810 = vmatpush1.msra.mxu0 0.0
    %811 = vmatprep.subr.mxu0 0.0
    %812 = vmatpush1.msra.mxu0 0.0
    %813 = vmatprep.subr.mxu0 0.0
    %814 = vmatpush1.msra.mxu0 0.0
    %815 = vmatprep.subr.mxu0 0.0
    %816 = vmatpush1.msra.mxu0 0.0
    %817 = vmatprep.subr.mxu0 0.0
    %818 = vmatpush1.msra.mxu0 0.0
    %819 = vmatprep.subr.mxu0 0.0
    %820 = vmatpush1.msra.mxu0 0.0
    %821 = vmatprep.subr.mxu0 0.0
    %822 = vmatpush1.msra.mxu0 0.0
    %823 = vmatprep.subr.mxu0 0.0
    %824 = vmatpush1.msra.mxu0 0.0
    %825 = vmatprep.subr.mxu0 0.0
    %826 = vmatpush1.msra.mxu0 0.0
    %827 = vmatprep.subr.mxu0 0.0
    %828 = vmatpush1.msra.mxu0 0.0
    %829 = vmatprep.subr.mxu0 0.0
    %830 = vmatpush1.msra.mxu0 0.0
    %831 = vmatprep.subr.mxu0 0.0
    %832 = vmatpush1.msra.mxu0 %v158
    %833 = vmatprep.subr.mxu0 0.0
    %834 = vmatpush1.msra.mxu0 %v157
    %835 = vmatprep.subr.mxu0 0.0
    %836 = vmatpush1.msra.mxu0 %v156
    %837 = vmatprep.subr.mxu0 0.0
    %838 = vmatpush1.msra.mxu0 %v155
    %839 = vmatprep.subr.mxu0 0.0
    %840 = vmatpush2.msra.mxu0 0.0
    %841 = vmatprep.subr.mxu0 0.0
    %842 = vmatpush2.msra.mxu0 0.0
    %843 = vmatprep.subr.mxu0 0.0
    %844 = vmatpush2.msra.mxu0 0.0
    %845 = vmatprep.subr.mxu0 0.0
    %846 = vmatpush2.msra.mxu0 0.0
    %847 = vmatprep.subr.mxu0 0.0
    %848 = vmatpush2.msra.mxu0 0.0
    %849 = vmatprep.subr.mxu0 0.0
    %850 = vmatpush2.msra.mxu0 0.0
    %851 = vmatprep.subr.mxu0 0.0
    %852 = vmatpush2.msra.mxu0 0.0
    %853 = vmatprep.subr.mxu0 0.0
    %854 = vmatpush2.msra.mxu0 0.0
    %855 = vmatprep.subr.mxu0 0.0
    %856 = vmatpush2.msra.mxu0 0.0
    %857 = vmatprep.subr.mxu0 0.0
    %858 = vmatpush2.msra.mxu0 0.0
    %859 = vmatprep.subr.mxu0 0.0
    %860 = vmatpush2.msra.mxu0 0.0
    %861 = vmatprep.subr.mxu0 0.0
    %862 = vmatpush2.msra.mxu0 0.0
    %863 = vmatprep.subr.mxu0 0.0
    %864 = vmatpush2.msra.mxu0 0.0
    %865 = vmatprep.subr.mxu0 0.0
    %866 = vmatpush2.msra.mxu0 0.0
    %867 = vmatprep.subr.mxu0 0.0
    %868 = vmatpush2.msra.mxu0 0.0
    %869 = vmatprep.subr.mxu0 0.0
    %870 = vmatpush2.msra.mxu0 0.0
    %871 = vmatprep.mubr.f32.mxu0 0.0
    %872 = vmatmul.mubr.f32.gmra.mxu0 %v805
    %v873 = vpop.f32.mrf.mxu0
    %v874 = vadd.f32 0.0, %v873
    %v875 = vpop.f32.mrf.mxu0
    %876 = vdwg.mxu0
    %v877 = vadd.f32 %v804, %v874
    %v878 = vtanh.pop %v877
    %v879 = vxor.u32 %v877, 2147483648
    %v880 = vmul.f32 %v879, 1.442695
    %v881 = vpow.pop %v880
    %v882 = vadd.f32 %v881, 1.0
    %v883 = vrcp.pop %v882
    %v884 = vmul.f32 1.0, %v883
    %v885 = vsel %vm172, %v878, %v884
    %v886 = vmul.f32 %v885, %v686
    %888 = vrot.lane.b32.xlu0 %v885, 64
    %v889 = vpop.permute.xlu0 %888
    %v891 = vmul.f32 %v885, %v889
    %893 = vrot.lane.b32.xlu0 %v891, 32
    %v894 = vpop.permute.xlu0 %893
    %v896 = vadd.f32 %v886, %v894
    %v897 = vtanh.pop %v896
    %899 = vrot.lane.b32.xlu0 %v897, 64
    %v900 = vpop.permute.xlu0 %899
    %v902 = vmul.f32 %v885, %v900
    %904 = vrot.lane.b32.xlu0 %v902, 32
    %v905 = vpop.permute.xlu0 %904
    %907 = vrot.lane.b32.xlu0 %v798, 64
    %v908 = vpop.permute.xlu0 %907
    %v910 = vsel %vm174, %v905, %v908
    %v912 = vsel %vm279, %v910, 0
    %914 = vmatprep.subr.mxu0 0.0
    %915 = vmatpush1.msra.mxu0 0.0
    %916 = vmatprep.subr.mxu0 0.0
    %917 = vmatpush1.msra.mxu0 0.0
    %918 = vmatprep.subr.mxu0 0.0
    %919 = vmatpush1.msra.mxu0 0.0
    %920 = vmatprep.subr.mxu0 0.0
    %921 = vmatpush1.msra.mxu0 0.0
    %922 = vmatprep.subr.mxu0 0.0
    %923 = vmatpush1.msra.mxu0 0.0
    %924 = vmatprep.subr.mxu0 0.0
    %925 = vmatpush1.msra.mxu0 0.0
    %926 = vmatprep.subr.mxu0 0.0
    %927 = vmatpush1.msra.mxu0 0.0
    %928 = vmatprep.subr.mxu0 0.0
    %929 = vmatpush1.msra.mxu0 0.0
    %930 = vmatprep.subr.mxu0 0.0
    %931 = vmatpush1.msra.mxu0 %v166
    %932 = vmatprep.subr.mxu0 0.0
    %933 = vmatpush1.msra.mxu0 %v165
    %934 = vmatprep.subr.mxu0 0.0
    %935 = vmatpush1.msra.mxu0 %v164
    %936 = vmatprep.subr.mxu0 0.0
    %937 = vmatpush1.msra.mxu0 %v163
    %938 = vmatprep.subr.mxu0 0.0
    %939 = vmatpush1.msra.mxu0 %v162
    %940 = vmatprep.subr.mxu0 0.0
    %941 = vmatpush1.msra.mxu0 %v161
    %942 = vmatprep.subr.mxu0 0.0
    %943 = vmatpush1.msra.mxu0 %v160
    %944 = vmatprep.subr.mxu0 0.0
    %945 = vmatpush1.msra.mxu0 %v159
    %946 = vmatprep.subr.mxu0 0.0
    %947 = vmatpush2.msra.mxu0 0.0
    %948 = vmatprep.subr.mxu0 0.0
    %949 = vmatpush2.msra.mxu0 0.0
    %950 = vmatprep.subr.mxu0 0.0
    %951 = vmatpush2.msra.mxu0 0.0
    %952 = vmatprep.subr.mxu0 0.0
    %953 = vmatpush2.msra.mxu0 0.0
    %954 = vmatprep.subr.mxu0 0.0
    %955 = vmatpush2.msra.mxu0 0.0
    %956 = vmatprep.subr.mxu0 0.0
    %957 = vmatpush2.msra.mxu0 0.0
    %958 = vmatprep.subr.mxu0 0.0
    %959 = vmatpush2.msra.mxu0 0.0
    %960 = vmatprep.subr.mxu0 0.0
    %961 = vmatpush2.msra.mxu0 0.0
    %962 = vmatprep.subr.mxu0 0.0
    %963 = vmatpush2.msra.mxu0 0.0
    %964 = vmatprep.subr.mxu0 0.0
    %965 = vmatpush2.msra.mxu0 0.0
    %966 = vmatprep.subr.mxu0 0.0
    %967 = vmatpush2.msra.mxu0 0.0
    %968 = vmatprep.subr.mxu0 0.0
    %969 = vmatpush2.msra.mxu0 0.0
    %970 = vmatprep.subr.mxu0 0.0
    %971 = vmatpush2.msra.mxu0 0.0
    %972 = vmatprep.subr.mxu0 0.0
    %973 = vmatpush2.msra.mxu0 0.0
    %974 = vmatprep.subr.mxu0 0.0
    %975 = vmatpush2.msra.mxu0 0.0
    %976 = vmatprep.subr.mxu0 0.0
    %977 = vmatpush2.msra.mxu0 0.0
    %978 = vmatprep.mubr.f32.mxu0 0.0
    %979 = vmatmul.mubr.f32.gmra.mxu0 %v912
    %v980 = vpop.f32.mrf.mxu0
    %v981 = vadd.f32 %v167, %v980
    %v982 = vpop.f32.mrf.mxu0
    %983 = vdwg.mxu0
    %v984 = vtanh.pop %v981
    %v985 = vxor.u32 %v981, 2147483648
    %v986 = vmul.f32 %v985, 1.442695
    %v987 = vpow.pop %v986
    %v988 = vadd.f32 %v987, 1.0
    %v989 = vrcp.pop %v988
    %v990 = vmul.f32 1.0, %v989
    %v991 = vsel %vm172, %v984, %v990
    %v992 = vmul.f32 %v991, %v792
    %994 = vrot.lane.b32.xlu0 %v991, 64
    %v995 = vpop.permute.xlu0 %994
    %v997 = vmul.f32 %v991, %v995
    %999 = vrot.lane.b32.xlu0 %v997, 32
    %v1000 = vpop.permute.xlu0 %999
    %v1002 = vadd.f32 %v992, %v1000
    %v1003 = vtanh.pop %v1002
    %1005 = vrot.lane.b32.xlu0 %v1003, 64
    %v1006 = vpop.permute.xlu0 %1005
    %v1008 = vmul.f32 %v991, %v1006
    %1010 = vrot.lane.b32.xlu0 %v1008, 32
    %v1011 = vpop.permute.xlu0 %1010
    %1013 = vst.msk [vmem:[#allocation3 + $0x3] sm:$0x1] %vm382, %v1011
    %v1014 = vld [vmem:[#allocation2 + $0x4] sm:$0x1]
    %v1015 = vsel %vm174, %v905, 0
    %1017 = vmatprep.subr.mxu0 0.0
    %1018 = vmatpush1.msra.mxu0 0.0
    %1019 = vmatprep.subr.mxu0 0.0
    %1020 = vmatpush1.msra.mxu0 0.0
    %1021 = vmatprep.subr.mxu0 0.0
    %1022 = vmatpush1.msra.mxu0 0.0
    %1023 = vmatprep.subr.mxu0 0.0
    %1024 = vmatpush1.msra.mxu0 0.0
    %1025 = vmatprep.subr.mxu0 0.0
    %1026 = vmatpush1.msra.mxu0 0.0
    %1027 = vmatprep.subr.mxu0 0.0
    %1028 = vmatpush1.msra.mxu0 0.0
    %1029 = vmatprep.subr.mxu0 0.0
    %1030 = vmatpush1.msra.mxu0 0.0
    %1031 = vmatprep.subr.mxu0 0.0
    %1032 = vmatpush1.msra.mxu0 0.0
    %1033 = vmatprep.subr.mxu0 0.0
    %1034 = vmatpush1.msra.mxu0 0.0
    %1035 = vmatprep.subr.mxu0 0.0
    %1036 = vmatpush1.msra.mxu0 0.0
    %1037 = vmatprep.subr.mxu0 0.0
    %1038 = vmatpush1.msra.mxu0 0.0
    %1039 = vmatprep.subr.mxu0 0.0
    %1040 = vmatpush1.msra.mxu0 0.0
    %1041 = vmatprep.subr.mxu0 0.0
    %1042 = vmatpush1.msra.mxu0 %v158
    %1043 = vmatprep.subr.mxu0 0.0
    %1044 = vmatpush1.msra.mxu0 %v157
    %1045 = vmatprep.subr.mxu0 0.0
    %1046 = vmatpush1.msra.mxu0 %v156
    %1047 = vmatprep.subr.mxu0 0.0
    %1048 = vmatpush1.msra.mxu0 %v155
    %1049 = vmatprep.subr.mxu0 0.0
    %1050 = vmatpush2.msra.mxu0 0.0
    %1051 = vmatprep.subr.mxu0 0.0
    %1052 = vmatpush2.msra.mxu0 0.0
    %1053 = vmatprep.subr.mxu0 0.0
    %1054 = vmatpush2.msra.mxu0 0.0
    %1055 = vmatprep.subr.mxu0 0.0
    %1056 = vmatpush2.msra.mxu0 0.0
    %1057 = vmatprep.subr.mxu0 0.0
    %1058 = vmatpush2.msra.mxu0 0.0
    %1059 = vmatprep.subr.mxu0 0.0
    %1060 = vmatpush2.msra.mxu0 0.0
    %1061 = vmatprep.subr.mxu0 0.0
    %1062 = vmatpush2.msra.mxu0 0.0
    %1063 = vmatprep.subr.mxu0 0.0
    %1064 = vmatpush2.msra.mxu0 0.0
    %1065 = vmatprep.subr.mxu0 0.0
    %1066 = vmatpush2.msra.mxu0 0.0
    %1067 = vmatprep.subr.mxu0 0.0
    %1068 = vmatpush2.msra.mxu0 0.0
    %1069 = vmatprep.subr.mxu0 0.0
    %1070 = vmatpush2.msra.mxu0 0.0
    %1071 = vmatprep.subr.mxu0 0.0
    %1072 = vmatpush2.msra.mxu0 0.0
    %1073 = vmatprep.subr.mxu0 0.0
    %1074 = vmatpush2.msra.mxu0 0.0
    %1075 = vmatprep.subr.mxu0 0.0
    %1076 = vmatpush2.msra.mxu0 0.0
    %1077 = vmatprep.subr.mxu0 0.0
    %1078 = vmatpush2.msra.mxu0 0.0
    %1079 = vmatprep.subr.mxu0 0.0
    %1080 = vmatpush2.msra.mxu0 0.0
    %1081 = vmatprep.mubr.f32.mxu0 0.0
    %1082 = vmatmul.mubr.f32.gmra.mxu0 %v1015
    %v1083 = vpop.f32.mrf.mxu0
    %v1084 = vadd.f32 0.0, %v1083
    %v1085 = vpop.f32.mrf.mxu0
    %1086 = vdwg.mxu0
    %v1087 = vadd.f32 %v1014, %v1084
    %v1088 = vtanh.pop %v1087
    %v1089 = vxor.u32 %v1087, 2147483648
    %v1090 = vmul.f32 %v1089, 1.442695
    %v1091 = vpow.pop %v1090
    %v1092 = vadd.f32 %v1091, 1.0
    %v1093 = vrcp.pop %v1092
    %v1094 = vmul.f32 1.0, %v1093
    %v1095 = vsel %vm172, %v1088, %v1094
    %v1096 = vmul.f32 %v1095, %v896
    %1098 = vrot.lane.b32.xlu0 %v1095, 64
    %v1099 = vpop.permute.xlu0 %1098
    %v1101 = vmul.f32 %v1095, %v1099
    %1103 = vrot.lane.b32.xlu0 %v1101, 32
    %v1104 = vpop.permute.xlu0 %1103
    %v1106 = vadd.f32 %v1096, %v1104
    %v1107 = vtanh.pop %v1106
    %1109 = vrot.lane.b32.xlu0 %v1107, 64
    %v1110 = vpop.permute.xlu0 %1109
    %v1112 = vmul.f32 %v1095, %v1110
    %1114 = vrot.lane.b32.xlu0 %v1112, 32
    %v1115 = vpop.permute.xlu0 %1114
    %1117 = vrot.lane.b32.xlu0 %v1008, 64
    %v1118 = vpop.permute.xlu0 %1117
    %v1120 = vsel %vm174, %v1115, %v1118
    %v1122 = vsel %vm279, %v1120, 0
    %1124 = vmatprep.subr.mxu0 0.0
    %1125 = vmatpush1.msra.mxu0 0.0
    %1126 = vmatprep.subr.mxu0 0.0
    %1127 = vmatpush1.msra.mxu0 0.0
    %1128 = vmatprep.subr.mxu0 0.0
    %1129 = vmatpush1.msra.mxu0 0.0
    %1130 = vmatprep.subr.mxu0 0.0
    %1131 = vmatpush1.msra.mxu0 0.0
    %1132 = vmatprep.subr.mxu0 0.0
    %1133 = vmatpush1.msra.mxu0 0.0
    %1134 = vmatprep.subr.mxu0 0.0
    %1135 = vmatpush1.msra.mxu0 0.0
    %1136 = vmatprep.subr.mxu0 0.0
    %1137 = vmatpush1.msra.mxu0 0.0
    %1138 = vmatprep.subr.mxu0 0.0
    %1139 = vmatpush1.msra.mxu0 0.0
    %1140 = vmatprep.subr.mxu0 0.0
    %1141 = vmatpush1.msra.mxu0 %v166
    %1142 = vmatprep.subr.mxu0 0.0
    %1143 = vmatpush1.msra.mxu0 %v165
    %1144 = vmatprep.subr.mxu0 0.0
    %1145 = vmatpush1.msra.mxu0 %v164
    %1146 = vmatprep.subr.mxu0 0.0
    %1147 = vmatpush1.msra.mxu0 %v163
    %1148 = vmatprep.subr.mxu0 0.0
    %1149 = vmatpush1.msra.mxu0 %v162
    %1150 = vmatprep.subr.mxu0 0.0
    %1151 = vmatpush1.msra.mxu0 %v161
    %1152 = vmatprep.subr.mxu0 0.0
    %1153 = vmatpush1.msra.mxu0 %v160
    %1154 = vmatprep.subr.mxu0 0.0
    %1155 = vmatpush1.msra.mxu0 %v159
    %1156 = vmatprep.subr.mxu0 0.0
    %1157 = vmatpush2.msra.mxu0 0.0
    %1158 = vmatprep.subr.mxu0 0.0
    %1159 = vmatpush2.msra.mxu0 0.0
    %1160 = vmatprep.subr.mxu0 0.0
    %1161 = vmatpush2.msra.mxu0 0.0
    %1162 = vmatprep.subr.mxu0 0.0
    %1163 = vmatpush2.msra.mxu0 0.0
    %1164 = vmatprep.subr.mxu0 0.0
    %1165 = vmatpush2.msra.mxu0 0.0
    %1166 = vmatprep.subr.mxu0 0.0
    %1167 = vmatpush2.msra.mxu0 0.0
    %1168 = vmatprep.subr.mxu0 0.0
    %1169 = vmatpush2.msra.mxu0 0.0
    %1170 = vmatprep.subr.mxu0 0.0
    %1171 = vmatpush2.msra.mxu0 0.0
    %1172 = vmatprep.subr.mxu0 0.0
    %1173 = vmatpush2.msra.mxu0 0.0
    %1174 = vmatprep.subr.mxu0 0.0
    %1175 = vmatpush2.msra.mxu0 0.0
    %1176 = vmatprep.subr.mxu0 0.0
    %1177 = vmatpush2.msra.mxu0 0.0
    %1178 = vmatprep.subr.mxu0 0.0
    %1179 = vmatpush2.msra.mxu0 0.0
    %1180 = vmatprep.subr.mxu0 0.0
    %1181 = vmatpush2.msra.mxu0 0.0
    %1182 = vmatprep.subr.mxu0 0.0
    %1183 = vmatpush2.msra.mxu0 0.0
    %1184 = vmatprep.subr.mxu0 0.0
    %1185 = vmatpush2.msra.mxu0 0.0
    %1186 = vmatprep.subr.mxu0 0.0
    %1187 = vmatpush2.msra.mxu0 0.0
    %1188 = vmatprep.mubr.f32.mxu0 0.0
    %1189 = vmatmul.mubr.f32.gmra.mxu0 %v1122
    %v1190 = vpop.f32.mrf.mxu0
    %v1191 = vadd.f32 %v167, %v1190
    %v1192 = vpop.f32.mrf.mxu0
    %1193 = vdwg.mxu0
    %v1194 = vtanh.pop %v1191
    %v1195 = vxor.u32 %v1191, 2147483648
    %v1196 = vmul.f32 %v1195, 1.442695
    %v1197 = vpow.pop %v1196
    %v1198 = vadd.f32 %v1197, 1.0
    %v1199 = vrcp.pop %v1198
    %v1200 = vmul.f32 1.0, %v1199
    %v1201 = vsel %vm172, %v1194, %v1200
    %v1202 = vmul.f32 %v1201, %v1002
    %1204 = vrot.lane.b32.xlu0 %v1201, 64
    %v1205 = vpop.permute.xlu0 %1204
    %v1207 = vmul.f32 %v1201, %v1205
    %1209 = vrot.lane.b32.xlu0 %v1207, 32
    %v1210 = vpop.permute.xlu0 %1209
    %v1212 = vadd.f32 %v1202, %v1210
    %v1213 = vtanh.pop %v1212
    %1215 = vrot.lane.b32.xlu0 %v1213, 64
    %v1216 = vpop.permute.xlu0 %1215
    %v1218 = vmul.f32 %v1201, %v1216
    %1220 = vrot.lane.b32.xlu0 %v1218, 32
    %v1221 = vpop.permute.xlu0 %1220
    %1223 = vst.msk [vmem:[#allocation3 + $0x4] sm:$0x1] %vm382, %v1221
    %v1224 = vld [vmem:[#allocation2 + $0x5] sm:$0x1]
    %v1225 = vsel %vm174, %v1115, 0
    %1227 = vmatprep.subr.mxu0 0.0
    %1228 = vmatpush1.msra.mxu0 0.0
    %1229 = vmatprep.subr.mxu0 0.0
    %1230 = vmatpush1.msra.mxu0 0.0
    %1231 = vmatprep.subr.mxu0 0.0
    %1232 = vmatpush1.msra.mxu0 0.0
    %1233 = vmatprep.subr.mxu0 0.0
    %1234 = vmatpush1.msra.mxu0 0.0
    %1235 = vmatprep.subr.mxu0 0.0
    %1236 = vmatpush1.msra.mxu0 0.0
    %1237 = vmatprep.subr.mxu0 0.0
    %1238 = vmatpush1.msra.mxu0 0.0
    %1239 = vmatprep.subr.mxu0 0.0
    %1240 = vmatpush1.msra.mxu0 0.0
    %1241 = vmatprep.subr.mxu0 0.0
    %1242 = vmatpush1.msra.mxu0 0.0
    %1243 = vmatprep.subr.mxu0 0.0
    %1244 = vmatpush1.msra.mxu0 0.0
    %1245 = vmatprep.subr.mxu0 0.0
    %1246 = vmatpush1.msra.mxu0 0.0
    %1247 = vmatprep.subr.mxu0 0.0
    %1248 = vmatpush1.msra.mxu0 0.0
    %1249 = vmatprep.subr.mxu0 0.0
    %1250 = vmatpush1.msra.mxu0 0.0
    %1251 = vmatprep.subr.mxu0 0.0
    %1252 = vmatpush1.msra.mxu0 %v158
    %1253 = vmatprep.subr.mxu0 0.0
    %1254 = vmatpush1.msra.mxu0 %v157
    %1255 = vmatprep.subr.mxu0 0.0
    %1256 = vmatpush1.msra.mxu0 %v156
    %1257 = vmatprep.subr.mxu0 0.0
    %1258 = vmatpush1.msra.mxu0 %v155
    %1259 = vmatprep.subr.mxu0 0.0
    %1260 = vmatpush2.msra.mxu0 0.0
    %1261 = vmatprep.subr.mxu0 0.0
    %1262 = vmatpush2.msra.mxu0 0.0
    %1263 = vmatprep.subr.mxu0 0.0
    %1264 = vmatpush2.msra.mxu0 0.0
    %1265 = vmatprep.subr.mxu0 0.0
    %1266 = vmatpush2.msra.mxu0 0.0
    %1267 = vmatprep.subr.mxu0 0.0
    %1268 = vmatpush2.msra.mxu0 0.0
    %1269 = vmatprep.subr.mxu0 0.0
    %1270 = vmatpush2.msra.mxu0 0.0
    %1271 = vmatprep.subr.mxu0 0.0
    %1272 = vmatpush2.msra.mxu0 0.0
    %1273 = vmatprep.subr.mxu0 0.0
    %1274 = vmatpush2.msra.mxu0 0.0
    %1275 = vmatprep.subr.mxu0 0.0
    %1276 = vmatpush2.msra.mxu0 0.0
    %1277 = vmatprep.subr.mxu0 0.0
    %1278 = vmatpush2.msra.mxu0 0.0
    %1279 = vmatprep.subr.mxu0 0.0
    %1280 = vmatpush2.msra.mxu0 0.0
    %1281 = vmatprep.subr.mxu0 0.0
    %1282 = vmatpush2.msra.mxu0 0.0
    %1283 = vmatprep.subr.mxu0 0.0
    %1284 = vmatpush2.msra.mxu0 0.0
    %1285 = vmatprep.subr.mxu0 0.0
    %1286 = vmatpush2.msra.mxu0 0.0
    %1287 = vmatprep.subr.mxu0 0.0
    %1288 = vmatpush2.msra.mxu0 0.0
    %1289 = vmatprep.subr.mxu0 0.0
    %1290 = vmatpush2.msra.mxu0 0.0
    %1291 = vmatprep.mubr.f32.mxu0 0.0
    %1292 = vmatmul.mubr.f32.gmra.mxu0 %v1225
    %v1293 = vpop.f32.mrf.mxu0
    %v1294 = vadd.f32 0.0, %v1293
    %v1295 = vpop.f32.mrf.mxu0
    %1296 = vdwg.mxu0
    %v1297 = vadd.f32 %v1224, %v1294
    %v1298 = vtanh.pop %v1297
    %v1299 = vxor.u32 %v1297, 2147483648
    %v1300 = vmul.f32 %v1299, 1.442695
    %v1301 = vpow.pop %v1300
    %v1302 = vadd.f32 %v1301, 1.0
    %v1303 = vrcp.pop %v1302
    %v1304 = vmul.f32 1.0, %v1303
    %v1305 = vsel %vm172, %v1298, %v1304
    %v1306 = vmul.f32 %v1305, %v1106
    %1308 = vrot.lane.b32.xlu0 %v1305, 64
    %v1309 = vpop.permute.xlu0 %1308
    %v1311 = vmul.f32 %v1305, %v1309
    %1313 = vrot.lane.b32.xlu0 %v1311, 32
    %v1314 = vpop.permute.xlu0 %1313
    %v1316 = vadd.f32 %v1306, %v1314
    %v1317 = vtanh.pop %v1316
    %1319 = vrot.lane.b32.xlu0 %v1317, 64
    %v1320 = vpop.permute.xlu0 %1319
    %v1322 = vmul.f32 %v1305, %v1320
    %1324 = vrot.lane.b32.xlu0 %v1322, 32
    %v1325 = vpop.permute.xlu0 %1324
    %1327 = vrot.lane.b32.xlu0 %v1218, 64
    %v1328 = vpop.permute.xlu0 %1327
    %v1330 = vsel %vm174, %v1325, %v1328
    %v1332 = vsel %vm279, %v1330, 0
    %1334 = vmatprep.subr.mxu0 0.0
    %1335 = vmatpush1.msra.mxu0 0.0
    %1336 = vmatprep.subr.mxu0 0.0
    %1337 = vmatpush1.msra.mxu0 0.0
    %1338 = vmatprep.subr.mxu0 0.0
    %1339 = vmatpush1.msra.mxu0 0.0
    %1340 = vmatprep.subr.mxu0 0.0
    %1341 = vmatpush1.msra.mxu0 0.0
    %1342 = vmatprep.subr.mxu0 0.0
    %1343 = vmatpush1.msra.mxu0 0.0
    %1344 = vmatprep.subr.mxu0 0.0
    %1345 = vmatpush1.msra.mxu0 0.0
    %1346 = vmatprep.subr.mxu0 0.0
    %1347 = vmatpush1.msra.mxu0 0.0
    %1348 = vmatprep.subr.mxu0 0.0
    %1349 = vmatpush1.msra.mxu0 0.0
    %1350 = vmatprep.subr.mxu0 0.0
    %1351 = vmatpush1.msra.mxu0 %v166
    %1352 = vmatprep.subr.mxu0 0.0
    %1353 = vmatpush1.msra.mxu0 %v165
    %1354 = vmatprep.subr.mxu0 0.0
    %1355 = vmatpush1.msra.mxu0 %v164
    %1356 = vmatprep.subr.mxu0 0.0
    %1357 = vmatpush1.msra.mxu0 %v163
    %1358 = vmatprep.subr.mxu0 0.0
    %1359 = vmatpush1.msra.mxu0 %v162
    %1360 = vmatprep.subr.mxu0 0.0
    %1361 = vmatpush1.msra.mxu0 %v161
    %1362 = vmatprep.subr.mxu0 0.0
    %1363 = vmatpush1.msra.mxu0 %v160
    %1364 = vmatprep.subr.mxu0 0.0
    %1365 = vmatpush1.msra.mxu0 %v159
    %1366 = vmatprep.subr.mxu0 0.0
    %1367 = vmatpush2.msra.mxu0 0.0
    %1368 = vmatprep.subr.mxu0 0.0
    %1369 = vmatpush2.msra.mxu0 0.0
    %1370 = vmatprep.subr.mxu0 0.0
    %1371 = vmatpush2.msra.mxu0 0.0
    %1372 = vmatprep.subr.mxu0 0.0
    %1373 = vmatpush2.msra.mxu0 0.0
    %1374 = vmatprep.subr.mxu0 0.0
    %1375 = vmatpush2.msra.mxu0 0.0
    %1376 = vmatprep.subr.mxu0 0.0
    %1377 = vmatpush2.msra.mxu0 0.0
    %1378 = vmatprep.subr.mxu0 0.0
    %1379 = vmatpush2.msra.mxu0 0.0
    %1380 = vmatprep.subr.mxu0 0.0
    %1381 = vmatpush2.msra.mxu0 0.0
    %1382 = vmatprep.subr.mxu0 0.0
    %1383 = vmatpush2.msra.mxu0 0.0
    %1384 = vmatprep.subr.mxu0 0.0
    %1385 = vmatpush2.msra.mxu0 0.0
    %1386 = vmatprep.subr.mxu0 0.0
    %1387 = vmatpush2.msra.mxu0 0.0
    %1388 = vmatprep.subr.mxu0 0.0
    %1389 = vmatpush2.msra.mxu0 0.0
    %1390 = vmatprep.subr.mxu0 0.0
    %1391 = vmatpush2.msra.mxu0 0.0
    %1392 = vmatprep.subr.mxu0 0.0
    %1393 = vmatpush2.msra.mxu0 0.0
    %1394 = vmatprep.subr.mxu0 0.0
    %1395 = vmatpush2.msra.mxu0 0.0
    %1396 = vmatprep.subr.mxu0 0.0
    %1397 = vmatpush2.msra.mxu0 0.0
    %1398 = vmatprep.mubr.f32.mxu0 0.0
    %1399 = vmatmul.mubr.f32.gmra.mxu0 %v1332
    %v1400 = vpop.f32.mrf.mxu0
    %v1401 = vadd.f32 %v167, %v1400
    %v1402 = vpop.f32.mrf.mxu0
    %1403 = vdwg.mxu0
    %v1404 = vtanh.pop %v1401
    %v1405 = vxor.u32 %v1401, 2147483648
    %v1406 = vmul.f32 %v1405, 1.442695
    %v1407 = vpow.pop %v1406
    %v1408 = vadd.f32 %v1407, 1.0
    %v1409 = vrcp.pop %v1408
    %v1410 = vmul.f32 1.0, %v1409
    %v1411 = vsel %vm172, %v1404, %v1410
    %v1412 = vmul.f32 %v1411, %v1212
    %1414 = vrot.lane.b32.xlu0 %v1411, 64
    %v1415 = vpop.permute.xlu0 %1414
    %v1417 = vmul.f32 %v1411, %v1415
    %1419 = vrot.lane.b32.xlu0 %v1417, 32
    %v1420 = vpop.permute.xlu0 %1419
    %v1422 = vadd.f32 %v1412, %v1420
    %v1423 = vtanh.pop %v1422
    %1425 = vrot.lane.b32.xlu0 %v1423, 64
    %v1426 = vpop.permute.xlu0 %1425
    %v1428 = vmul.f32 %v1411, %v1426
    %1430 = vrot.lane.b32.xlu0 %v1428, 32
    %v1431 = vpop.permute.xlu0 %1430
    %1433 = vst.msk [vmem:[#allocation3 + $0x5] sm:$0x1] %vm382, %v1431
    %v1434 = vld [vmem:[#allocation2 + $0x6] sm:$0x1]
    %v1435 = vsel %vm174, %v1325, 0
    %1437 = vmatprep.subr.mxu0 0.0
    %1438 = vmatpush1.msra.mxu0 0.0
    %1439 = vmatprep.subr.mxu0 0.0
    %1440 = vmatpush1.msra.mxu0 0.0
    %1441 = vmatprep.subr.mxu0 0.0
    %1442 = vmatpush1.msra.mxu0 0.0
    %1443 = vmatprep.subr.mxu0 0.0
    %1444 = vmatpush1.msra.mxu0 0.0
    %1445 = vmatprep.subr.mxu0 0.0
    %1446 = vmatpush1.msra.mxu0 0.0
    %1447 = vmatprep.subr.mxu0 0.0
    %1448 = vmatpush1.msra.mxu0 0.0
    %1449 = vmatprep.subr.mxu0 0.0
    %1450 = vmatpush1.msra.mxu0 0.0
    %1451 = vmatprep.subr.mxu0 0.0
    %1452 = vmatpush1.msra.mxu0 0.0
    %1453 = vmatprep.subr.mxu0 0.0
    %1454 = vmatpush1.msra.mxu0 0.0
    %1455 = vmatprep.subr.mxu0 0.0
    %1456 = vmatpush1.msra.mxu0 0.0
    %1457 = vmatprep.subr.mxu0 0.0
    %1458 = vmatpush1.msra.mxu0 0.0
    %1459 = vmatprep.subr.mxu0 0.0
    %1460 = vmatpush1.msra.mxu0 0.0
    %1461 = vmatprep.subr.mxu0 0.0
    %1462 = vmatpush1.msra.mxu0 %v158
    %1463 = vmatprep.subr.mxu0 0.0
    %1464 = vmatpush1.msra.mxu0 %v157
    %1465 = vmatprep.subr.mxu0 0.0
    %1466 = vmatpush1.msra.mxu0 %v156
    %1467 = vmatprep.subr.mxu0 0.0
    %1468 = vmatpush1.msra.mxu0 %v155
    %1469 = vmatprep.subr.mxu0 0.0
    %1470 = vmatpush2.msra.mxu0 0.0
    %1471 = vmatprep.subr.mxu0 0.0
    %1472 = vmatpush2.msra.mxu0 0.0
    %1473 = vmatprep.subr.mxu0 0.0
    %1474 = vmatpush2.msra.mxu0 0.0
    %1475 = vmatprep.subr.mxu0 0.0
    %1476 = vmatpush2.msra.mxu0 0.0
    %1477 = vmatprep.subr.mxu0 0.0
    %1478 = vmatpush2.msra.mxu0 0.0
    %1479 = vmatprep.subr.mxu0 0.0
    %1480 = vmatpush2.msra.mxu0 0.0
    %1481 = vmatprep.subr.mxu0 0.0
    %1482 = vmatpush2.msra.mxu0 0.0
    %1483 = vmatprep.subr.mxu0 0.0
    %1484 = vmatpush2.msra.mxu0 0.0
    %1485 = vmatprep.subr.mxu0 0.0
    %1486 = vmatpush2.msra.mxu0 0.0
    %1487 = vmatprep.subr.mxu0 0.0
    %1488 = vmatpush2.msra.mxu0 0.0
    %1489 = vmatprep.subr.mxu0 0.0
    %1490 = vmatpush2.msra.mxu0 0.0
    %1491 = vmatprep.subr.mxu0 0.0
    %1492 = vmatpush2.msra.mxu0 0.0
    %1493 = vmatprep.subr.mxu0 0.0
    %1494 = vmatpush2.msra.mxu0 0.0
    %1495 = vmatprep.subr.mxu0 0.0
    %1496 = vmatpush2.msra.mxu0 0.0
    %1497 = vmatprep.subr.mxu0 0.0
    %1498 = vmatpush2.msra.mxu0 0.0
    %1499 = vmatprep.subr.mxu0 0.0
    %1500 = vmatpush2.msra.mxu0 0.0
    %1501 = vmatprep.mubr.f32.mxu0 0.0
    %1502 = vmatmul.mubr.f32.gmra.mxu0 %v1435
    %v1503 = vpop.f32.mrf.mxu0
    %v1504 = vadd.f32 0.0, %v1503
    %v1505 = vpop.f32.mrf.mxu0
    %1506 = vdwg.mxu0
    %v1507 = vadd.f32 %v1434, %v1504
    %v1508 = vtanh.pop %v1507
    %v1509 = vxor.u32 %v1507, 2147483648
    %v1510 = vmul.f32 %v1509, 1.442695
    %v1511 = vpow.pop %v1510
    %v1512 = vadd.f32 %v1511, 1.0
    %v1513 = vrcp.pop %v1512
    %v1514 = vmul.f32 1.0, %v1513
    %v1515 = vsel %vm172, %v1508, %v1514
    %v1516 = vmul.f32 %v1515, %v1316
    %1518 = vrot.lane.b32.xlu0 %v1515, 64
    %v1519 = vpop.permute.xlu0 %1518
    %v1521 = vmul.f32 %v1515, %v1519
    %1523 = vrot.lane.b32.xlu0 %v1521, 32
    %v1524 = vpop.permute.xlu0 %1523
    %v1526 = vadd.f32 %v1516, %v1524
    %v1527 = vtanh.pop %v1526
    %1529 = vrot.lane.b32.xlu0 %v1527, 64
    %v1530 = vpop.permute.xlu0 %1529
    %v1532 = vmul.f32 %v1515, %v1530
    %1534 = vrot.lane.b32.xlu0 %v1532, 32
    %v1535 = vpop.permute.xlu0 %1534
    %1537 = vrot.lane.b32.xlu0 %v1428, 64
    %v1538 = vpop.permute.xlu0 %1537
    %v1540 = vsel %vm174, %v1535, %v1538
    %v1542 = vsel %vm279, %v1540, 0
    %1544 = vmatprep.subr.mxu0 0.0
    %1545 = vmatpush1.msra.mxu0 0.0
    %1546 = vmatprep.subr.mxu0 0.0
    %1547 = vmatpush1.msra.mxu0 0.0
    %1548 = vmatprep.subr.mxu0 0.0
    %1549 = vmatpush1.msra.mxu0 0.0
    %1550 = vmatprep.subr.mxu0 0.0
    %1551 = vmatpush1.msra.mxu0 0.0
    %1552 = vmatprep.subr.mxu0 0.0
    %1553 = vmatpush1.msra.mxu0 0.0
    %1554 = vmatprep.subr.mxu0 0.0
    %1555 = vmatpush1.msra.mxu0 0.0
    %1556 = vmatprep.subr.mxu0 0.0
    %1557 = vmatpush1.msra.mxu0 0.0
    %1558 = vmatprep.subr.mxu0 0.0
    %1559 = vmatpush1.msra.mxu0 0.0
    %1560 = vmatprep.subr.mxu0 0.0
    %1561 = vmatpush1.msra.mxu0 %v166
    %1562 = vmatprep.subr.mxu0 0.0
    %1563 = vmatpush1.msra.mxu0 %v165
    %1564 = vmatprep.subr.mxu0 0.0
    %1565 = vmatpush1.msra.mxu0 %v164
    %1566 = vmatprep.subr.mxu0 0.0
    %1567 = vmatpush1.msra.mxu0 %v163
    %1568 = vmatprep.subr.mxu0 0.0
    %1569 = vmatpush1.msra.mxu0 %v162
    %1570 = vmatprep.subr.mxu0 0.0
    %1571 = vmatpush1.msra.mxu0 %v161
    %1572 = vmatprep.subr.mxu0 0.0
    %1573 = vmatpush1.msra.mxu0 %v160
    %1574 = vmatprep.subr.mxu0 0.0
    %1575 = vmatpush1.msra.mxu0 %v159
    %1576 = vmatprep.subr.mxu0 0.0
    %1577 = vmatpush2.msra.mxu0 0.0
    %1578 = vmatprep.subr.mxu0 0.0
    %1579 = vmatpush2.msra.mxu0 0.0
    %1580 = vmatprep.subr.mxu0 0.0
    %1581 = vmatpush2.msra.mxu0 0.0
    %1582 = vmatprep.subr.mxu0 0.0
    %1583 = vmatpush2.msra.mxu0 0.0
    %1584 = vmatprep.subr.mxu0 0.0
    %1585 = vmatpush2.msra.mxu0 0.0
    %1586 = vmatprep.subr.mxu0 0.0
    %1587 = vmatpush2.msra.mxu0 0.0
    %1588 = vmatprep.subr.mxu0 0.0
    %1589 = vmatpush2.msra.mxu0 0.0
    %1590 = vmatprep.subr.mxu0 0.0
    %1591 = vmatpush2.msra.mxu0 0.0
    %1592 = vmatprep.subr.mxu0 0.0
    %1593 = vmatpush2.msra.mxu0 0.0
    %1594 = vmatprep.subr.mxu0 0.0
    %1595 = vmatpush2.msra.mxu0 0.0
    %1596 = vmatprep.subr.mxu0 0.0
    %1597 = vmatpush2.msra.mxu0 0.0
    %1598 = vmatprep.subr.mxu0 0.0
    %1599 = vmatpush2.msra.mxu0 0.0
    %1600 = vmatprep.subr.mxu0 0.0
    %1601 = vmatpush2.msra.mxu0 0.0
    %1602 = vmatprep.subr.mxu0 0.0
    %1603 = vmatpush2.msra.mxu0 0.0
    %1604 = vmatprep.subr.mxu0 0.0
    %1605 = vmatpush2.msra.mxu0 0.0
    %1606 = vmatprep.subr.mxu0 0.0
    %1607 = vmatpush2.msra.mxu0 0.0
    %1608 = vmatprep.mubr.f32.mxu0 0.0
    %1609 = vmatmul.mubr.f32.gmra.mxu0 %v1542
    %v1610 = vpop.f32.mrf.mxu0
    %v1611 = vadd.f32 %v167, %v1610
    %v1612 = vpop.f32.mrf.mxu0
    %1613 = vdwg.mxu0
    %v1614 = vtanh.pop %v1611
    %v1615 = vxor.u32 %v1611, 2147483648
    %v1616 = vmul.f32 %v1615, 1.442695
    %v1617 = vpow.pop %v1616
    %v1618 = vadd.f32 %v1617, 1.0
    %v1619 = vrcp.pop %v1618
    %v1620 = vmul.f32 1.0, %v1619
    %v1621 = vsel %vm172, %v1614, %v1620
    %v1622 = vmul.f32 %v1621, %v1422
    %1624 = vrot.lane.b32.xlu0 %v1621, 64
    %v1625 = vpop.permute.xlu0 %1624
    %v1627 = vmul.f32 %v1621, %v1625
    %1629 = vrot.lane.b32.xlu0 %v1627, 32
    %v1630 = vpop.permute.xlu0 %1629
    %v1632 = vadd.f32 %v1622, %v1630
    %v1633 = vtanh.pop %v1632
    %1635 = vrot.lane.b32.xlu0 %v1633, 64
    %v1636 = vpop.permute.xlu0 %1635
    %v1638 = vmul.f32 %v1621, %v1636
    %1640 = vrot.lane.b32.xlu0 %v1638, 32
    %v1641 = vpop.permute.xlu0 %1640
    %1643 = vst.msk [vmem:[#allocation3 + $0x6] sm:$0x1] %vm382, %v1641
    %v1644 = vld [vmem:[#allocation2 + $0x7] sm:$0x1]
    %v1645 = vsel %vm174, %v1535, 0
    %1647 = vmatprep.subr.mxu0 0.0
    %1648 = vmatpush1.msra.mxu0 0.0
    %1649 = vmatprep.subr.mxu0 0.0
    %1650 = vmatpush1.msra.mxu0 0.0
    %1651 = vmatprep.subr.mxu0 0.0
    %1652 = vmatpush1.msra.mxu0 0.0
    %1653 = vmatprep.subr.mxu0 0.0
    %1654 = vmatpush1.msra.mxu0 0.0
    %1655 = vmatprep.subr.mxu0 0.0
    %1656 = vmatpush1.msra.mxu0 0.0
    %1657 = vmatprep.subr.mxu0 0.0
    %1658 = vmatpush1.msra.mxu0 0.0
    %1659 = vmatprep.subr.mxu0 0.0
    %1660 = vmatpush1.msra.mxu0 0.0
    %1661 = vmatprep.subr.mxu0 0.0
    %1662 = vmatpush1.msra.mxu0 0.0
    %1663 = vmatprep.subr.mxu0 0.0
    %1664 = vmatpush1.msra.mxu0 0.0
    %1665 = vmatprep.subr.mxu0 0.0
    %1666 = vmatpush1.msra.mxu0 0.0
    %1667 = vmatprep.subr.mxu0 0.0
    %1668 = vmatpush1.msra.mxu0 0.0
    %1669 = vmatprep.subr.mxu0 0.0
    %1670 = vmatpush1.msra.mxu0 0.0
    %1671 = vmatprep.subr.mxu0 0.0
    %1672 = vmatpush1.msra.mxu0 %v158
    %1673 = vmatprep.subr.mxu0 0.0
    %1674 = vmatpush1.msra.mxu0 %v157
    %1675 = vmatprep.subr.mxu0 0.0
    %1676 = vmatpush1.msra.mxu0 %v156
    %1677 = vmatprep.subr.mxu0 0.0
    %1678 = vmatpush1.msra.mxu0 %v155
    %1679 = vmatprep.subr.mxu0 0.0
    %1680 = vmatpush2.msra.mxu0 0.0
    %1681 = vmatprep.subr.mxu0 0.0
    %1682 = vmatpush2.msra.mxu0 0.0
    %1683 = vmatprep.subr.mxu0 0.0
    %1684 = vmatpush2.msra.mxu0 0.0
    %1685 = vmatprep.subr.mxu0 0.0
    %1686 = vmatpush2.msra.mxu0 0.0
    %1687 = vmatprep.subr.mxu0 0.0
    %1688 = vmatpush2.msra.mxu0 0.0
    %1689 = vmatprep.subr.mxu0 0.0
    %1690 = vmatpush2.msra.mxu0 0.0
    %1691 = vmatprep.subr.mxu0 0.0
    %1692 = vmatpush2.msra.mxu0 0.0
    %1693 = vmatprep.subr.mxu0 0.0
    %1694 = vmatpush2.msra.mxu0 0.0
    %1695 = vmatprep.subr.mxu0 0.0
    %1696 = vmatpush2.msra.mxu0 0.0
    %1697 = vmatprep.subr.mxu0 0.0
    %1698 = vmatpush2.msra.mxu0 0.0
    %1699 = vmatprep.subr.mxu0 0.0
    %1700 = vmatpush2.msra.mxu0 0.0
    %1701 = vmatprep.subr.mxu0 0.0
    %1702 = vmatpush2.msra.mxu0 0.0
    %1703 = vmatprep.subr.mxu0 0.0
    %1704 = vmatpush2.msra.mxu0 0.0
    %1705 = vmatprep.subr.mxu0 0.0
    %1706 = vmatpush2.msra.mxu0 0.0
    %1707 = vmatprep.subr.mxu0 0.0
    %1708 = vmatpush2.msra.mxu0 0.0
    %1709 = vmatprep.subr.mxu0 0.0
    %1710 = vmatpush2.msra.mxu0 0.0
    %1711 = vmatprep.mubr.f32.mxu0 0.0
    %1712 = vmatmul.mubr.f32.gmra.mxu0 %v1645
    %v1713 = vpop.f32.mrf.mxu0
    %v1714 = vadd.f32 0.0, %v1713
    %v1715 = vpop.f32.mrf.mxu0
    %1716 = vdwg.mxu0
    %v1717 = vadd.f32 %v1644, %v1714
    %v1718 = vtanh.pop %v1717
    %v1719 = vxor.u32 %v1717, 2147483648
    %v1720 = vmul.f32 %v1719, 1.442695
    %v1721 = vpow.pop %v1720
    %v1722 = vadd.f32 %v1721, 1.0
    %v1723 = vrcp.pop %v1722
    %v1724 = vmul.f32 1.0, %v1723
    %v1725 = vsel %vm172, %v1718, %v1724
    %v1726 = vmul.f32 %v1725, %v1526
    %1728 = vrot.lane.b32.xlu0 %v1725, 64
    %v1729 = vpop.permute.xlu0 %1728
    %v1731 = vmul.f32 %v1725, %v1729
    %1733 = vrot.lane.b32.xlu0 %v1731, 32
    %v1734 = vpop.permute.xlu0 %1733
    %v1736 = vadd.f32 %v1726, %v1734
    %v1737 = vtanh.pop %v1736
    %1739 = vrot.lane.b32.xlu0 %v1737, 64
    %v1740 = vpop.permute.xlu0 %1739
    %v1742 = vmul.f32 %v1725, %v1740
    %1744 = vrot.lane.b32.xlu0 %v1742, 32
    %v1745 = vpop.permute.xlu0 %1744
    %1747 = vrot.lane.b32.xlu0 %v1638, 64
    %v1748 = vpop.permute.xlu0 %1747
    %v1750 = vsel %vm174, %v1745, %v1748
    %v1752 = vsel %vm279, %v1750, 0
    %1754 = vmatprep.subr.mxu0 0.0
    %1755 = vmatpush1.msra.mxu0 0.0
    %1756 = vmatprep.subr.mxu0 0.0
    %1757 = vmatpush1.msra.mxu0 0.0
    %1758 = vmatprep.subr.mxu0 0.0
    %1759 = vmatpush1.msra.mxu0 0.0
    %1760 = vmatprep.subr.mxu0 0.0
    %1761 = vmatpush1.msra.mxu0 0.0
    %1762 = vmatprep.subr.mxu0 0.0
    %1763 = vmatpush1.msra.mxu0 0.0
    %1764 = vmatprep.subr.mxu0 0.0
    %1765 = vmatpush1.msra.mxu0 0.0
    %1766 = vmatprep.subr.mxu0 0.0
    %1767 = vmatpush1.msra.mxu0 0.0
    %1768 = vmatprep.subr.mxu0 0.0
    %1769 = vmatpush1.msra.mxu0 0.0
    %1770 = vmatprep.subr.mxu0 0.0
    %1771 = vmatpush1.msra.mxu0 %v166
    %1772 = vmatprep.subr.mxu0 0.0
    %1773 = vmatpush1.msra.mxu0 %v165
    %1774 = vmatprep.subr.mxu0 0.0
    %1775 = vmatpush1.msra.mxu0 %v164
    %1776 = vmatprep.subr.mxu0 0.0
    %1777 = vmatpush1.msra.mxu0 %v163
    %1778 = vmatprep.subr.mxu0 0.0
    %1779 = vmatpush1.msra.mxu0 %v162
    %1780 = vmatprep.subr.mxu0 0.0
    %1781 = vmatpush1.msra.mxu0 %v161
    %1782 = vmatprep.subr.mxu0 0.0
    %1783 = vmatpush1.msra.mxu0 %v160
    %1784 = vmatprep.subr.mxu0 0.0
    %1785 = vmatpush1.msra.mxu0 %v159
    %1786 = vmatprep.subr.mxu0 0.0
    %1787 = vmatpush2.msra.mxu0 0.0
    %1788 = vmatprep.subr.mxu0 0.0
    %1789 = vmatpush2.msra.mxu0 0.0
    %1790 = vmatprep.subr.mxu0 0.0
    %1791 = vmatpush2.msra.mxu0 0.0
    %1792 = vmatprep.subr.mxu0 0.0
    %1793 = vmatpush2.msra.mxu0 0.0
    %1794 = vmatprep.subr.mxu0 0.0
    %1795 = vmatpush2.msra.mxu0 0.0
    %1796 = vmatprep.subr.mxu0 0.0
    %1797 = vmatpush2.msra.mxu0 0.0
    %1798 = vmatprep.subr.mxu0 0.0
    %1799 = vmatpush2.msra.mxu0 0.0
    %1800 = vmatprep.subr.mxu0 0.0
    %1801 = vmatpush2.msra.mxu0 0.0
    %1802 = vmatprep.subr.mxu0 0.0
    %1803 = vmatpush2.msra.mxu0 0.0
    %1804 = vmatprep.subr.mxu0 0.0
    %1805 = vmatpush2.msra.mxu0 0.0
    %1806 = vmatprep.subr.mxu0 0.0
    %1807 = vmatpush2.msra.mxu0 0.0
    %1808 = vmatprep.subr.mxu0 0.0
    %1809 = vmatpush2.msra.mxu0 0.0
    %1810 = vmatprep.subr.mxu0 0.0
    %1811 = vmatpush2.msra.mxu0 0.0
    %1812 = vmatprep.subr.mxu0 0.0
    %1813 = vmatpush2.msra.mxu0 0.0
    %1814 = vmatprep.subr.mxu0 0.0
    %1815 = vmatpush2.msra.mxu0 0.0
    %1816 = vmatprep.subr.mxu0 0.0
    %1817 = vmatpush2.msra.mxu0 0.0
    %1818 = vmatprep.mubr.f32.mxu0 0.0
    %1819 = vmatmul.mubr.f32.gmra.mxu0 %v1752
    %v1820 = vpop.f32.mrf.mxu0
    %v1821 = vadd.f32 %v167, %v1820
    %v1822 = vpop.f32.mrf.mxu0
    %1823 = vdwg.mxu0
    %v1824 = vtanh.pop %v1821
    %v1825 = vxor.u32 %v1821, 2147483648
    %v1826 = vmul.f32 %v1825, 1.442695
    %v1827 = vpow.pop %v1826
    %v1828 = vadd.f32 %v1827, 1.0
    %v1829 = vrcp.pop %v1828
    %v1830 = vmul.f32 1.0, %v1829
    %v1831 = vsel %vm172, %v1824, %v1830
    %v1832 = vmul.f32 %v1831, %v1632
    %1834 = vrot.lane.b32.xlu0 %v1831, 64
    %v1835 = vpop.permute.xlu0 %1834
    %v1837 = vmul.f32 %v1831, %v1835
    %1839 = vrot.lane.b32.xlu0 %v1837, 32
    %v1840 = vpop.permute.xlu0 %1839
    %v1842 = vadd.f32 %v1832, %v1840
    %v1843 = vtanh.pop %v1842
    %1845 = vrot.lane.b32.xlu0 %v1843, 64
    %v1846 = vpop.permute.xlu0 %1845
    %v1848 = vmul.f32 %v1831, %v1846
    %1850 = vrot.lane.b32.xlu0 %v1848, 32
    %v1851 = vpop.permute.xlu0 %1850
    %1853 = vst.msk [vmem:[#allocation3 + $0x7] sm:$0x1] %vm382, %v1851
    %v1854 = vld [vmem:[#allocation3] sm:$0xff]
    %v1855 = vld [vmem:[%s6] sm:$0xff]
    %v1856 = vld [vmem:[%s6 + $0x8] sm:$0xff]
    %v1857 = vld [vmem:[%s6 + $0x10] sm:$0xff]
    %v1858 = vld [vmem:[%s6 + $0x18] sm:$0xff]
    %v1859 = vld [vmem:[%s7] sm:$0x1]
    %v1861 = vlaneseq
    %v1862 = vshrl.u32 %v1861, 7
    %v1863 = vsub.s32 0, %v1862
    %v1864 = vrot.slane %v1859, %v1863
    %v1867 = vsel %vm174, %v1854, 0
    %1869 = vmatprep.subr.mxu0 0.0
    %1870 = vmatpush1.msra.mxu0 0.0
    %1871 = vmatprep.subr.mxu0 0.0
    %1872 = vmatpush1.msra.mxu0 0.0
    %1873 = vmatprep.subr.mxu0 0.0
    %1874 = vmatpush1.msra.mxu0 0.0
    %1875 = vmatprep.subr.mxu0 0.0
    %1876 = vmatpush1.msra.mxu0 0.0
    %1877 = vmatprep.subr.mxu0 0.0
    %1878 = vmatpush1.msra.mxu0 0.0
    %1879 = vmatprep.subr.mxu0 0.0
    %1880 = vmatpush1.msra.mxu0 0.0
    %1881 = vmatprep.subr.mxu0 0.0
    %1882 = vmatpush1.msra.mxu0 0.0
    %1883 = vmatprep.subr.mxu0 0.0
    %1884 = vmatpush1.msra.mxu0 0.0
    %1885 = vmatprep.subr.mxu0 0.0
    %1886 = vmatpush1.msra.mxu0 0.0
    %1887 = vmatprep.subr.mxu0 0.0
    %1888 = vmatpush1.msra.mxu0 0.0
    %1889 = vmatprep.subr.mxu0 0.0
    %1890 = vmatpush1.msra.mxu0 0.0
    %1891 = vmatprep.subr.mxu0 0.0
    %1892 = vmatpush1.msra.mxu0 0.0
    %1893 = vmatprep.subr.mxu0 0.0
    %1894 = vmatpush1.msra.mxu0 %v1858
    %1895 = vmatprep.subr.mxu0 0.0
    %1896 = vmatpush1.msra.mxu0 %v1857
    %1897 = vmatprep.subr.mxu0 0.0
    %1898 = vmatpush1.msra.mxu0 %v1856
    %1899 = vmatprep.subr.mxu0 0.0
    %1900 = vmatpush1.msra.mxu0 %v1855
    %1901 = vmatprep.subr.mxu0 0.0
    %1902 = vmatpush2.msra.mxu0 0.0
    %1903 = vmatprep.subr.mxu0 0.0
    %1904 = vmatpush2.msra.mxu0 0.0
    %1905 = vmatprep.subr.mxu0 0.0
    %1906 = vmatpush2.msra.mxu0 0.0
    %1907 = vmatprep.subr.mxu0 0.0
    %1908 = vmatpush2.msra.mxu0 0.0
    %1909 = vmatprep.subr.mxu0 0.0
    %1910 = vmatpush2.msra.mxu0 0.0
    %1911 = vmatprep.subr.mxu0 0.0
    %1912 = vmatpush2.msra.mxu0 0.0
    %1913 = vmatprep.subr.mxu0 0.0
    %1914 = vmatpush2.msra.mxu0 0.0
    %1915 = vmatprep.subr.mxu0 0.0
    %1916 = vmatpush2.msra.mxu0 0.0
    %1917 = vmatprep.subr.mxu0 0.0
    %1918 = vmatpush2.msra.mxu0 0.0
    %1919 = vmatprep.subr.mxu0 0.0
    %1920 = vmatpush2.msra.mxu0 0.0
    %1921 = vmatprep.subr.mxu0 0.0
    %1922 = vmatpush2.msra.mxu0 0.0
    %1923 = vmatprep.subr.mxu0 0.0
    %1924 = vmatpush2.msra.mxu0 0.0
    %1925 = vmatprep.subr.mxu0 0.0
    %1926 = vmatpush2.msra.mxu0 0.0
    %1927 = vmatprep.subr.mxu0 0.0
    %1928 = vmatpush2.msra.mxu0 0.0
    %1929 = vmatprep.subr.mxu0 0.0
    %1930 = vmatpush2.msra.mxu0 0.0
    %1931 = vmatprep.subr.mxu0 0.0
    %1932 = vmatpush2.msra.mxu0 0.0
    %1933 = vmatprep.mubr.f32.mxu0 0.0
    %1934 = vmatmul.mubr.f32.gmra.mxu0 %v1867
    %v1935 = vpop.f32.mrf.mxu0
    %v1936 = vadd.f32 %v1864, %v1935
    %v1937 = vpop.f32.mrf.mxu0
    %1938 = vdwg.mxu0
    %vm1939 = vcmask 15360
    %v1940 = vsel %vm1939, %v1936, -inf
    %1941 = vmax.xlane.f32.xlu0 %v1940
    %v1942 = vpop.xlane.xlu0 %1941
    %v1943 = vsub.f32 %v1936, %v1942
    %v1944 = vmul.f32 %v1943, 1.442695
    %v1945 = vpow.pop %v1944
    %v1946 = vsel %vm1939, %v1945, 0.0
    %1947 = vadd.xlane.f32.xlu0 %v1946
    %v1948 = vpop.xlane.xlu0 %1947
    %v1949 = vlog2.pop %v1948
    %v1950 = vmul.f32 %v1949, 0.6931472
    %v1951 = vadd.f32 %v1942, %v1950
    %1952 = vst.msk [vmem:[%s9] sm:$0xff] %vm1939, %v1936
    %v1953 = vsub.f32 %v1936, %v1951
    %1954 = vst.msk [vmem:[%s8] sm:$0xff] %vm1939, %v1953
    // Predicated region
    $region46: #{tpu_custom_call.1} parent=1 // pred_check
      _
    $region47: #{tpu_custom_call.1} parent=1 // pred_check_branch
      %1956 = sbr.rel (0) target = $region49
    $region48: #{tpu_custom_call.1} parent=1 // pred_region
      _
    $region49: #{tpu_custom_call.1} parent=1 // pred_fallthru
      _
    // Predicated region
    $region50: #{tpu_custom_call.1} parent=1 // pred_check
      _
    $region51: #{tpu_custom_call.1} parent=1 // pred_check_branch
      %1958 = sbr.rel (0) target = $region53
    $region52: #{tpu_custom_call.1} parent=1 // pred_region
      _
    $region53: #{tpu_custom_call.1} parent=1 // pred_fallthru
      _
    // Predicated region
    $region54: #{tpu_custom_call.1} parent=1 // pred_check
      _
    $region55: #{tpu_custom_call.1} parent=1 // pred_check_branch
      %1960 = sbr.rel (0) target = $region57
    $region56: #{tpu_custom_call.1} parent=1 // pred_region
      _
    $region57: #{tpu_custom_call.1} parent=1 // pred_fallthru
      _
    // Predicated region
    $region58: #{tpu_custom_call.1} parent=1 // pred_check
      _
    $region59: #{tpu_custom_call.1} parent=1 // pred_check_branch
      %1962 = sbr.rel (0) target = $region61
    $region60: #{tpu_custom_call.1} parent=1 // pred_region
      _
    $region61: #{tpu_custom_call.1} parent=1 // pred_fallthru
      _
    %1963 = vsyncpa [#allocation5], 1
    %1964 = vsyncpa [#allocation7], 1

</llo_original>
